<compile_context>
chip_gen: v5e
topology: v5e:2x2
jax: 0.10.0
libtpu: 0.0.40
codegen_flags: <defaults>
</compile_context>

<pallas_src>
import functools
import math

import jax
import jax.numpy as jnp
from jax.experimental import pallas as pl
from jax.experimental.pallas import tpu as pltpu


ACT_DTYPE = jnp.bfloat16          # inter-kernel activation storage dtype

_PARALLEL_1D = pltpu.CompilerParams(dimension_semantics=("parallel",))


def _row_block(m, target=512):
    """Fixed row block; ragged last block handled by the cdiv grid."""
    return m if m <= target else target


# ---------------------------------------------------------------------------
# in-kernel helpers
# ---------------------------------------------------------------------------

def _gelu(x):
    # TODO(synk): HF RoBERTa uses exact erf-GELU; tanh approximation here.
    c = 0.7978845608028654  # sqrt(2/pi)
    return 0.5 * x * (1.0 + jnp.tanh(c * (x + 0.044715 * x * x * x)))


def _layernorm(z, g, b, eps):
    mean = jnp.mean(z, axis=-1, keepdims=True)
    var = jnp.mean((z - mean) * (z - mean), axis=-1, keepdims=True)
    inv = jax.lax.rsqrt(var + eps)
    return (z - mean) * inv * g + b


# ---------------------------------------------------------------------------
# Pallas kernels
# ---------------------------------------------------------------------------

def _ln_kernel(x_ref, g_ref, b_ref, o_ref, *, eps):
    z = x_ref[...].astype(jnp.float32)
    o_ref[...] = _layernorm(z, g_ref[...], b_ref[...], eps).astype(o_ref.dtype)


def pallas_layernorm(x, gamma, beta, eps):
    """LayerNorm over last dim; x:(M,H) -> (M,H) bf16."""
    M, H = x.shape
    bm = _row_block(M)
    row = pl.BlockSpec((bm, H), lambda i: (i, 0))
    vec = pl.BlockSpec((1, H), lambda i: (0, 0))
    return pl.pallas_call(
        functools.partial(_ln_kernel, eps=eps),
        out_shape=jax.ShapeDtypeStruct((M, H), ACT_DTYPE),
        grid=(pl.cdiv(M, bm),),
        in_specs=[row, vec, vec],
        out_specs=row,
        compiler_params=_PARALLEL_1D,
    )(x, gamma.reshape(1, H), beta.reshape(1, H))


def _linear_kernel(x_ref, w_ref, b_ref, o_ref):
    y = jnp.dot(x_ref[...].astype(jnp.bfloat16), w_ref[...],
                preferred_element_type=jnp.float32) + b_ref[...]
    o_ref[...] = y.astype(o_ref.dtype)


def pallas_linear(x, w, b):
    """y = x @ w + b; x:(M,K) bf16, w:(K,N) bf16, b:(N,) f32 -> (M,N) bf16."""
    M, K = x.shape
    N = w.shape[1]
    bm = _row_block(M)
    return pl.pallas_call(
        _linear_kernel,
        out_shape=jax.ShapeDtypeStruct((M, N), ACT_DTYPE),
        grid=(pl.cdiv(M, bm),),
        in_specs=[pl.BlockSpec((bm, K), lambda i: (i, 0)),
                  pl.BlockSpec((K, N), lambda i: (0, 0)),
                  pl.BlockSpec((1, N), lambda i: (0, 0))],
        out_specs=pl.BlockSpec((bm, N), lambda i: (i, 0)),
        compiler_params=_PARALLEL_1D,
    )(x, w, b.reshape(1, N))


def _linear_res_ln_kernel(x_ref, w_ref, b_ref, r_ref, g_ref, bt_ref, o_ref,
                          *, eps):
    # projection + residual add + LayerNorm fused in the matmul epilogue
    y = jnp.dot(x_ref[...].astype(jnp.bfloat16), w_ref[...],
                preferred_element_type=jnp.float32) + b_ref[...]
    z = y + r_ref[...].astype(jnp.float32)
    o_ref[...] = _layernorm(z, g_ref[...], bt_ref[...], eps).astype(o_ref.dtype)


def pallas_linear_residual_ln(x, w, b, residual, gamma, beta, eps):
    """LayerNorm(x @ w + b + residual); all activations bf16 in HBM."""
    M, K = x.shape
    N = w.shape[1]
    bm = _row_block(M)
    row_in = pl.BlockSpec((bm, K), lambda i: (i, 0))
    row_out = pl.BlockSpec((bm, N), lambda i: (i, 0))
    vec = pl.BlockSpec((1, N), lambda i: (0, 0))
    return pl.pallas_call(
        functools.partial(_linear_res_ln_kernel, eps=eps),
        out_shape=jax.ShapeDtypeStruct((M, N), ACT_DTYPE),
        grid=(pl.cdiv(M, bm),),
        in_specs=[row_in,
                  pl.BlockSpec((K, N), lambda i: (0, 0)),
                  vec,
                  row_out,
                  vec, vec],
        out_specs=row_out,
        compiler_params=_PARALLEL_1D,
    )(x, w, b.reshape(1, N), residual,
      gamma.reshape(1, N), beta.reshape(1, N))


def _ffn_res_ln_kernel(x_ref, wi_ref, bi_ref, wo_ref, bo_ref, g_ref, bt_ref,
                       o_ref, inter_ref, *, eps):
    # up-proj + GELU + down-proj + residual + LayerNorm, intermediate in VMEM
    x_bf = x_ref[...].astype(jnp.bfloat16)
    h = jnp.dot(x_bf, wi_ref[...], preferred_element_type=jnp.float32)
    h = h + bi_ref[...]
    inter_ref[...] = _gelu(h).astype(jnp.bfloat16)          # never hits HBM
    y = jnp.dot(inter_ref[...], wo_ref[...],
                preferred_element_type=jnp.float32) + bo_ref[...]
    z = y + x_ref[...].astype(jnp.float32)                  # residual = input
    o_ref[...] = _layernorm(z, g_ref[...], bt_ref[...], eps).astype(o_ref.dtype)


def pallas_ffn_residual_ln(x, wi, bi, wo, bo, gamma, beta, eps):
    """LayerNorm(gelu(x @ wi + bi) @ wo + bo + x); x:(M,H) bf16."""
    M, H = x.shape
    I = wi.shape[1]
    # bm=256 keeps (bm,I) scratch + both bf16 weights inside v7x's 64 MiB VMEM.
    bm = _row_block(M, target=256)
    row = pl.BlockSpec((bm, H), lambda i: (i, 0))
    vec_h = pl.BlockSpec((1, H), lambda i: (0, 0))
    vec_i = pl.BlockSpec((1, I), lambda i: (0, 0))
    return pl.pallas_call(
        functools.partial(_ffn_res_ln_kernel, eps=eps),
        out_shape=jax.ShapeDtypeStruct((M, H), ACT_DTYPE),
        grid=(pl.cdiv(M, bm),),
        in_specs=[row,
                  pl.BlockSpec((H, I), lambda i: (0, 0)),
                  vec_i,
                  pl.BlockSpec((I, H), lambda i: (0, 0)),
                  vec_h,
                  vec_h, vec_h],
        out_specs=row,
        scratch_shapes=[pltpu.VMEM((bm, I), jnp.bfloat16)],
        compiler_params=_PARALLEL_1D,
    )(x, wi, bi.reshape(1, I), wo, bo.reshape(1, H),
      gamma.reshape(1, H), beta.reshape(1, H))


def _attention_kernel(qkv_ref, m_ref, o_ref, *, num_heads, head_dim):
    # One batch element per grid step: all heads processed in-kernel from the
    # fused (S, 3H) QKV tile; ctx written back in (S, H) layout so no
    # transpose/relayout is ever needed in HBM.  The softmax scale is folded
    # into the Q projection weights at parameter-build time.
    H = num_heads * head_dim
    qkv = qkv_ref[...]                                # (S, 3H) bf16
    mask_bias = (m_ref[...] - 1.0) * 1e9              # (1, S) additive bias
    ctx_heads = []
    for h in range(num_heads):
        lo = h * head_dim
        q = qkv[:, lo:lo + head_dim]                  # (S, Dh)
        k = qkv[:, H + lo:H + lo + head_dim]
        v = qkv[:, 2 * H + lo:2 * H + lo + head_dim]
        s = jax.lax.dot_general(q, k, (((1,), (1,)), ((), ())),
                                preferred_element_type=jnp.float32)  # (S,S)
        s = s + mask_bias
        mx = jnp.max(s, axis=-1, keepdims=True)
        p = jnp.exp(s - mx)
        denom = jnp.sum(p, axis=-1, keepdims=True)
        p = p * pl.reciprocal(denom, approx=True)
        ctx_heads.append(jnp.dot(p.astype(jnp.bfloat16), v,
                                 preferred_element_type=jnp.float32))
    # single lane-dense (S, H) store instead of per-head masked stores
    o_ref[...] = jnp.concatenate(ctx_heads, axis=-1).astype(o_ref.dtype)


def pallas_attention(qkv, mask, num_heads):
    """qkv:(B,S,3H) bf16, mask:(B,1,S) f32 0/1 -> ctx:(B,S,H) bf16 (heads merged)."""
    B, S, H3 = qkv.shape
    H = H3 // 3
    Dh = H // num_heads
    return pl.pallas_call(
        functools.partial(_attention_kernel, num_heads=num_heads, head_dim=Dh),
        out_shape=jax.ShapeDtypeStruct((B, S, H), ACT_DTYPE),
        grid=(B,),
        in_specs=[pl.BlockSpec((None, S, H3), lambda b: (b, 0, 0)),
                  pl.BlockSpec((None, 1, S), lambda b: (b, 0, 0))],
        out_specs=pl.BlockSpec((None, S, H), lambda b: (b, 0, 0)),
        compiler_params=_PARALLEL_1D,
    )(qkv, mask)


def _head_kernel(x_ref, w1_ref, b1_ref, w2_ref, b2_ref, w3_ref, b3_ref,
                 pooled_ref, proj_ref):
    # pooler (tanh) + projection Linear->ReLU->Linear fused into one kernel.
    x = x_ref[...].astype(jnp.bfloat16)
    pooled = jnp.tanh(
        jnp.dot(x, w1_ref[...], preferred_element_type=jnp.float32)
        + b1_ref[...])
    pooled_ref[...] = pooled
    h = jnp.dot(pooled.astype(jnp.bfloat16), w2_ref[...],
                preferred_element_type=jnp.float32) + b2_ref[...]
    h = jnp.maximum(h, 0.0)
    proj_ref[...] = jnp.dot(h.astype(jnp.bfloat16), w3_ref[...],
                            preferred_element_type=jnp.float32) + b3_ref[...]


def pallas_pooler_projection(cls_tok, p):
    B, H = cls_tok.shape
    P = p["proj2_w"].shape[1]

    def full(shape):
        return pl.BlockSpec(shape, lambda *_: tuple(0 for _ in shape))

    return pl.pallas_call(
        _head_kernel,
        out_shape=(jax.ShapeDtypeStruct((B, H), jnp.float32),
                   jax.ShapeDtypeStruct((B, P), jnp.float32)),
        grid=(1,),  # tiny epilogue -> single block
        in_specs=[full((B, H)),
                  full((H, H)), full((1, H)),
                  full((H, H)), full((1, H)),
                  full((H, P)), full((1, P))],
        out_specs=(full((B, H)), full((B, P))),
    )(cls_tok, p["pool_w"], p["pool_b"].reshape(1, H),
      p["proj1_w"], p["proj1_b"].reshape(1, H),
      p["proj2_w"], p["proj2_b"].reshape(1, P))


# ---------------------------------------------------------------------------
# Model: parameters + forward (glue in JAX, compute in Pallas)
# ---------------------------------------------------------------------------

CFG = dict(
    vocab_size=100,
    max_positions=40,
    pad_id=1,
    hidden=32,          # embedding_dim (768 in the real model)
    heads=4,
    intermediate=64,
    layers=2,
    projection_dim=16,  # 256 in the real model
    ln_eps=1e-5,
)


def make_params(key, cfg):
    H, I, P = cfg["hidden"], cfg["intermediate"], cfg["projection_dim"]
    Dh = H // cfg["heads"]
    scale = 1.0 / math.sqrt(Dh)
    keys = iter(jax.random.split(key, 64))

    def lin(fan_in, fan_out):
        w = 0.02 * jax.random.normal(next(keys), (fan_in, fan_out), jnp.float32)
        b = jnp.zeros((fan_out,), jnp.float32)
        return w, b

    p = {
        "word_emb": 0.02 * jax.random.normal(next(keys), (cfg["vocab_size"], H)),
        "pos_emb": 0.02 * jax.random.normal(next(keys), (cfg["max_positions"], H)),
        "type_emb": 0.02 * jax.random.normal(next(keys), (1, H)),
        "emb_ln_g": jnp.ones((H,), jnp.float32),
        "emb_ln_b": jnp.zeros((H,), jnp.float32),
        "layers": [],
    }
    for _ in range(cfg["layers"]):
        lyr = {}
        wqkv, bqkv = lin(H, 3 * H)
        # fold the 1/sqrt(Dh) softmax scale into the Q third of the QKV proj
        wqkv = wqkv.at[:, :H].multiply(scale)
        bqkv = bqkv.at[:H].multiply(scale)
        lyr["wqkv"], lyr["bqkv"] = wqkv.astype(jnp.bfloat16), bqkv
        wo, bo = lin(H, H)
        lyr["wo"], lyr["bo"] = wo.astype(jnp.bfloat16), bo
        lyr["attn_ln_g"] = jnp.ones((H,), jnp.float32)
        lyr["attn_ln_b"] = jnp.zeros((H,), jnp.float32)
        wi, bi = lin(H, I)
        lyr["wi"], lyr["bi"] = wi.astype(jnp.bfloat16), bi
        wo2, bo2 = lin(I, H)
        lyr["wo2"], lyr["bo2"] = wo2.astype(jnp.bfloat16), bo2
        lyr["ffn_ln_g"] = jnp.ones((H,), jnp.float32)
        lyr["ffn_ln_b"] = jnp.zeros((H,), jnp.float32)
        p["layers"].append(lyr)
    pw, pb = lin(H, H)
    p["pool_w"], p["pool_b"] = pw.astype(jnp.bfloat16), pb
    w1, b1 = lin(H, H)
    p["proj1_w"], p["proj1_b"] = w1.astype(jnp.bfloat16), b1
    w2, b2 = lin(H, P)
    p["proj2_w"], p["proj2_b"] = w2.astype(jnp.bfloat16), b2
    return p


def roberta_embedding_model(params, input_ids, attention_mask, cfg):
    B, S = input_ids.shape
    H, nH = cfg["hidden"], cfg["heads"]
    eps = cfg["ln_eps"]

    # --- embeddings (gathers + position-id cumsum stay in JAX glue) ---
    pad_mask = (input_ids != cfg["pad_id"]).astype(jnp.int32)
    position_ids = jnp.cumsum(pad_mask, axis=1) * pad_mask + cfg["pad_id"]
    h = (params["word_emb"][input_ids]
         + params["pos_emb"][position_ids]
         + params["type_emb"][jnp.zeros_like(input_ids)])          # (B,S,H) f32
    h2 = pallas_layernorm(h.reshape(B * S, H),
                          params["emb_ln_g"], params["emb_ln_b"], eps)  # bf16

    # tiny (B,1,S) 0/1 mask; the additive bias is built in-kernel
    mask_f = attention_mask.astype(jnp.float32).reshape(B, 1, S)

    for lyr in params["layers"]:
        # fused QKV projection (scale pre-folded into Q weights)
        qkv = pallas_linear(h2, lyr["wqkv"], lyr["bqkv"])          # (B*S,3H) bf16
        # attention reads QKV per batch and writes ctx in (B,S,H) layout;
        # reshapes below are metadata-only (no transpose / HBM relayout)
        ctx = pallas_attention(qkv.reshape(B, S, 3 * H), mask_f, nH)
        ctx = ctx.reshape(B * S, H)
        # output projection + residual + LayerNorm fused
        h2 = pallas_linear_residual_ln(ctx, lyr["wo"], lyr["bo"], h2,
                                       lyr["attn_ln_g"], lyr["attn_ln_b"], eps)
        # fused FFN (up-proj + GELU + down-proj + residual + LayerNorm)
        h2 = pallas_ffn_residual_ln(h2, lyr["wi"], lyr["bi"],
                                    lyr["wo2"], lyr["bo2"],
                                    lyr["ffn_ln_g"], lyr["ffn_ln_b"], eps)

    # --- pooler + projection head fused into one kernel ---
    cls_tok = h2.reshape(B, S, H)[:, 0, :]                          # (B,H) bf16
    pooled, projection = pallas_pooler_projection(cls_tok, params)
    return pooled, projection


# ---------------------------------------------------------------------------
# Example run
# ---------------------------------------------------------------------------

if __name__ == "__main__":
    key = jax.random.PRNGKey(0)
    k_param, k_ids = jax.random.split(key)

    B, S = 2, 8
    params = make_params(k_param, CFG)

    input_ids = jax.random.randint(k_ids, (B, S), 2, CFG["vocab_size"],
                                   dtype=jnp.int32)
    attention_mask = jnp.array([[1, 1, 1, 1, 1, 1, 1, 1],
                                [1, 1, 1, 1, 1, 0, 0, 0]], dtype=jnp.int32)
    # padded positions carry the pad token id, as a RoBERTa tokenizer would emit
    input_ids = jnp.where(attention_mask == 1, input_ids, CFG["pad_id"])

    fwd = jax.jit(lambda p, ids, m: roberta_embedding_model(p, ids, m, CFG))
    pooled, projection = fwd(params, input_ids, attention_mask)
    jax.block_until_ready((pooled, projection))

    assert pooled.shape == (B, CFG["hidden"])
    assert projection.shape == (B, CFG["projection_dim"])
    assert jnp.all(jnp.isfinite(pooled)) and jnp.all(jnp.isfinite(projection))
    print("KERNEL_OK")
</pallas_src>

<mosaic_0001>
module attributes {stable_mosaic.version = 11 : i64} {
  func.func @_linear_kernel(%arg0: i32, %arg1: memref<16x32xbf16, #tpu.memory_space<vmem>>, %arg2: memref<32x96xbf16, #tpu.memory_space<vmem>>, %arg3: memref<1x96xf32, #tpu.memory_space<vmem>>, %arg4: memref<16x96xbf16, #tpu.memory_space<vmem>>) attributes {dimension_semantics = [#tpu.dimension_semantics<parallel>], iteration_bounds = array<i64: 1>, scalar_prefetch = 0 : i64, scratch_operands = 0 : i64, tpu.core_type = #tpu.core_type<tc>, window_params = [{transform_indices = @transform_0, window_bounds = array<i64: 16, 32>}, {pipeline_mode = #tpu.pipeline_mode<synchronous>, transform_indices = @transform_1, window_bounds = array<i64: 32, 96>}, {pipeline_mode = #tpu.pipeline_mode<synchronous>, transform_indices = @transform_2, window_bounds = array<i64: 1, 96>}, {transform_indices = @transform_3, window_bounds = array<i64: 16, 96>}]} {
    %c0 = arith.constant 0 : index
    %c0_0 = arith.constant 0 : index
    %0 = vector.load %arg1[%c0, %c0_0] : memref<16x32xbf16, #tpu.memory_space<vmem>>, vector<16x32xbf16>
    %c0_1 = arith.constant 0 : index
    %c0_2 = arith.constant 0 : index
    %1 = vector.load %arg2[%c0_1, %c0_2] : memref<32x96xbf16, #tpu.memory_space<vmem>>, vector<32x96xbf16>
    %cst = arith.constant dense<0.000000e+00> : vector<16x96xf32>
    %2 = tpu.matmul %0, %1, %cst {dimension_numbers = #tpu.dot_dimension_numbers<[1], [0], [0], [1], [0, 0, 1, 1], [], []>} : vector<16x32xbf16>, vector<32x96xbf16>, vector<16x96xf32> -> vector<16x96xf32>
    %c0_3 = arith.constant 0 : index
    %c0_4 = arith.constant 0 : index
    %3 = vector.load %arg3[%c0_3, %c0_4] : memref<1x96xf32, #tpu.memory_space<vmem>>, vector<1x96xf32>
    %4 = vector.broadcast %3 : vector<1x96xf32> to vector<16x96xf32>
    %5 = arith.addf %2, %4 : vector<16x96xf32>
    %6 = arith.truncf %5 : vector<16x96xf32> to vector<16x96xbf16>
    %c0_5 = arith.constant 0 : index
    %c0_6 = arith.constant 0 : index
    %7 = vector.load %arg4[%c0_5, %c0_6] : memref<16x96xbf16, #tpu.memory_space<vmem>>, vector<16x96xbf16>
    tpu.vector_store %arg4[%c0_5, %c0_6], %6 {strides = array<i32>} : memref<16x96xbf16, #tpu.memory_space<vmem>>, vector<16x96xbf16>,
    return
  }
  func.func @transform_0(%arg0: i32) -> (i32, i32) {
    %c0_i32 = arith.constant 0 : i32
    %c0_i32_0 = arith.constant 0 : i32
    return %arg0, %c0_i32 : i32, i32
  }
  func.func @transform_1(%arg0: i32) -> (i32, i32) {
    %c0_i32 = arith.constant 0 : i32
    %c0_i32_0 = arith.constant 0 : i32
    %c0_i32_1 = arith.constant 0 : i32
    return %c0_i32, %c0_i32_0 : i32, i32
  }
  func.func @transform_2(%arg0: i32) -> (i32, i32) {
    %c0_i32 = arith.constant 0 : i32
    %c0_i32_0 = arith.constant 0 : i32
    %c0_i32_1 = arith.constant 0 : i32
    return %c0_i32, %c0_i32_0 : i32, i32
  }
  func.func @transform_3(%arg0: i32) -> (i32, i32) {
    %c0_i32 = arith.constant 0 : i32
    %c0_i32_0 = arith.constant 0 : i32
    return %arg0, %c0_i32 : i32, i32
  }
}

module attributes {stable_mosaic.version = 11 : i64} {
  func.func @_ln_kernel(%arg0: i32, %arg1: memref<16x32xf32, #tpu.memory_space<vmem>>, %arg2: memref<1x32xf32, #tpu.memory_space<vmem>>, %arg3: memref<1x32xf32, #tpu.memory_space<vmem>>, %arg4: memref<16x32xbf16, #tpu.memory_space<vmem>>) attributes {dimension_semantics = [#tpu.dimension_semantics<parallel>], iteration_bounds = array<i64: 1>, scalar_prefetch = 0 : i64, scratch_operands = 0 : i64, tpu.core_type = #tpu.core_type<tc>, window_params = [{transform_indices = @transform_0, window_bounds = array<i64: 16, 32>}, {pipeline_mode = #tpu.pipeline_mode<synchronous>, transform_indices = @transform_1, window_bounds = array<i64: 1, 32>}, {pipeline_mode = #tpu.pipeline_mode<synchronous>, transform_indices = @transform_2, window_bounds = array<i64: 1, 32>}, {transform_indices = @transform_3, window_bounds = array<i64: 16, 32>}]} {
    %c0 = arith.constant 0 : index
    %c0_0 = arith.constant 0 : index
    %0 = vector.load %arg1[%c0, %c0_0] : memref<16x32xf32, #tpu.memory_space<vmem>>, vector<16x32xf32>
    %c0_1 = arith.constant 0 : index
    %c0_2 = arith.constant 0 : index
    %1 = vector.load %arg2[%c0_1, %c0_2] : memref<1x32xf32, #tpu.memory_space<vmem>>, vector<1x32xf32>
    %c0_3 = arith.constant 0 : index
    %c0_4 = arith.constant 0 : index
    %2 = vector.load %arg3[%c0_3, %c0_4] : memref<1x32xf32, #tpu.memory_space<vmem>>, vector<1x32xf32>
    %cst = arith.constant dense<0.000000e+00> : vector<16xf32>
    %3 = vector.multi_reduction <add>, %0, %cst [1] : vector<16x32xf32> to vector<16xf32>
    %4 = vector.shape_cast %3 : vector<16xf32> to vector<16x1xf32>
    %cst_5 = arith.constant 3.200000e+01 : f32
    %5 = vector.broadcast %cst_5 : f32 to vector<16x1xf32>
    %6 = arith.divf %4, %5 : vector<16x1xf32>
    %7 = vector.broadcast %6 : vector<16x1xf32> to vector<16x32xf32>
    %8 = arith.subf %0, %7 : vector<16x32xf32>
    %9 = vector.broadcast %6 : vector<16x1xf32> to vector<16x32xf32>
    %10 = arith.subf %0, %9 : vector<16x32xf32>
    %11 = arith.mulf %8, %10 : vector<16x32xf32>
    %cst_6 = arith.constant dense<0.000000e+00> : vector<16xf32>
    %12 = vector.multi_reduction <add>, %11, %cst_6 [1] : vector<16x32xf32> to vector<16xf32>
    %13 = vector.shape_cast %12 : vector<16xf32> to vector<16x1xf32>
    %cst_7 = arith.constant 3.200000e+01 : f32
    %14 = vector.broadcast %cst_7 : f32 to vector<16x1xf32>
    %15 = arith.divf %13, %14 : vector<16x1xf32>
    %cst_8 = arith.constant 9.99999974E-6 : f32
    %16 = vector.broadcast %cst_8 : f32 to vector<16x1xf32>
    %17 = arith.addf %15, %16 : vector<16x1xf32>
    %18 = math.rsqrt %17 : vector<16x1xf32>
    %19 = vector.broadcast %6 : vector<16x1xf32> to vector<16x32xf32>
    %20 = arith.subf %0, %19 : vector<16x32xf32>
    %21 = vector.broadcast %18 : vector<16x1xf32> to vector<16x32xf32>
    %22 = arith.mulf %20, %21 : vector<16x32xf32>
    %23 = vector.broadcast %1 : vector<1x32xf32> to vector<16x32xf32>
    %24 = arith.mulf %22, %23 : vector<16x32xf32>
    %25 = vector.broadcast %2 : vector<1x32xf32> to vector<16x32xf32>
    %26 = arith.addf %24, %25 : vector<16x32xf32>
    %27 = arith.truncf %26 : vector<16x32xf32> to vector<16x32xbf16>
    %c0_9 = arith.constant 0 : index
    %c0_10 = arith.constant 0 : index
    %28 = vector.load %arg4[%c0_9, %c0_10] : memref<16x32xbf16, #tpu.memory_space<vmem>>, vector<16x32xbf16>
    tpu.vector_store %arg4[%c0_9, %c0_10], %27 {strides = array<i32>} : memref<16x32xbf16, #tpu.memory_space<vmem>>, vector<16x32xbf16>,
    return
  }
  func.func @transform_0(%arg0: i32) -> (i32, i32) {
    %c0_i32 = arith.constant 0 : i32
    %c0_i32_0 = arith.constant 0 : i32
    return %arg0, %c0_i32 : i32, i32
  }
  func.func @transform_1(%arg0: i32) -> (i32, i32) {
    %c0_i32 = arith.constant 0 : i32
    %c0_i32_0 = arith.constant 0 : i32
    %c0_i32_1 = arith.constant 0 : i32
    return %c0_i32, %c0_i32_0 : i32, i32
  }
  func.func @transform_2(%arg0: i32) -> (i32, i32) {
    %c0_i32 = arith.constant 0 : i32
    %c0_i32_0 = arith.constant 0 : i32
    %c0_i32_1 = arith.constant 0 : i32
    return %c0_i32, %c0_i32_0 : i32, i32
  }
  func.func @transform_3(%arg0: i32) -> (i32, i32) {
    %c0_i32 = arith.constant 0 : i32
    %c0_i32_0 = arith.constant 0 : i32
    return %arg0, %c0_i32 : i32, i32
  }
}

module attributes {stable_mosaic.version = 11 : i64} {
  func.func @_attention_kernel(%arg0: i32, %arg1: memref<1x8x96xbf16, #tpu.memory_space<vmem>>, %arg2: memref<1x1x8xf32, #tpu.memory_space<vmem>>, %arg3: memref<1x8x32xbf16, #tpu.memory_space<vmem>>) attributes {dimension_semantics = [#tpu.dimension_semantics<parallel>], iteration_bounds = array<i64: 2>, scalar_prefetch = 0 : i64, scratch_operands = 0 : i64, tpu.core_type = #tpu.core_type<tc>, window_params = [{transform_indices = @transform_0, window_bounds = array<i64: 1, 8, 96>}, {transform_indices = @transform_1, window_bounds = array<i64: 1, 1, 8>}, {transform_indices = @transform_2, window_bounds = array<i64: 1, 8, 32>}]} {
    %c0 = arith.constant 0 : index
    %c0_0 = arith.constant 0 : index
    %c0_1 = arith.constant 0 : index
    %0 = vector.load %arg1[%c0, %c0_0, %c0_1] : memref<1x8x96xbf16, #tpu.memory_space<vmem>>, vector<1x8x96xbf16>
    %1 = vector.shape_cast %0 : vector<1x8x96xbf16> to vector<8x96xbf16>
    %c0_2 = arith.constant 0 : index
    %c0_3 = arith.constant 0 : index
    %c0_4 = arith.constant 0 : index
    %2 = vector.load %arg2[%c0_2, %c0_3, %c0_4] : memref<1x1x8xf32, #tpu.memory_space<vmem>>, vector<1x1x8xf32>
    %3 = vector.shape_cast %2 : vector<1x1x8xf32> to vector<1x8xf32>
    %cst = arith.constant 1.000000e+00 : f32
    %4 = vector.broadcast %cst : f32 to vector<1x8xf32>
    %5 = arith.subf %3, %4 : vector<1x8xf32>
    %cst_5 = arith.constant 1.000000e+09 : f32
    %6 = vector.broadcast %cst_5 : f32 to vector<1x8xf32>
    %7 = arith.mulf %5, %6 : vector<1x8xf32>
    %8 = vector.extract_strided_slice %1 {offsets = [0, 0], sizes = [8, 8], strides = [1, 1]} : vector<8x96xbf16> to vector<8x8xbf16>
    %9 = vector.extract_strided_slice %1 {offsets = [0, 32], sizes = [8, 8], strides = [1, 1]} : vector<8x96xbf16> to vector<8x8xbf16>
    %10 = vector.extract_strided_slice %1 {offsets = [0, 64], sizes = [8, 8], strides = [1, 1]} : vector<8x96xbf16> to vector<8x8xbf16>
    %cst_6 = arith.constant dense<0.000000e+00> : vector<8x8xf32>
    %11 = tpu.matmul %8, %9, %cst_6 {dimension_numbers = #tpu.dot_dimension_numbers<[1], [1], [0], [0], [0, 0, 1, 0], [], []>} : vector<8x8xbf16>, vector<8x8xbf16>, vector<8x8xf32> -> vector<8x8xf32>
    %12 = vector.broadcast %7 : vector<1x8xf32> to vector<8x8xf32>
    %13 = arith.addf %11, %12 : vector<8x8xf32>
    %cst_7 = arith.constant dense<0xFF800000> : vector<8xf32>
    %14 = vector.multi_reduction <maximumf>, %13, %cst_7 [1] : vector<8x8xf32> to vector<8xf32>
    %15 = vector.shape_cast %14 : vector<8xf32> to vector<8x1xf32>
    %16 = vector.broadcast %15 : vector<8x1xf32> to vector<8x8xf32>
    %17 = arith.subf %13, %16 : vector<8x8xf32>
    %18 = math.exp %17 : vector<8x8xf32>
    %cst_8 = arith.constant dense<0.000000e+00> : vector<8xf32>
    %19 = vector.multi_reduction <add>, %18, %cst_8 [1] : vector<8x8xf32> to vector<8xf32>
    %20 = vector.shape_cast %19 : vector<8xf32> to vector<8x1xf32>
    %21 = tpu.reciprocal %20 {approx = true} : vector<8x1xf32> -> vector<8x1xf32>
    %22 = vector.broadcast %21 : vector<8x1xf32> to vector<8x8xf32>
    %23 = arith.mulf %18, %22 : vector<8x8xf32>
    %24 = arith.truncf %23 : vector<8x8xf32> to vector<8x8xbf16>
    %cst_9 = arith.constant dense<0.000000e+00> : vector<8x8xf32>
    %25 = tpu.matmul %24, %10, %cst_9 {dimension_numbers = #tpu.dot_dimension_numbers<[1], [0], [0], [1], [0, 0, 1, 1], [], []>} : vector<8x8xbf16>, vector<8x8xbf16>, vector<8x8xf32> -> vector<8x8xf32>
    %26 = vector.extract_strided_slice %1 {offsets = [0, 8], sizes = [8, 8], strides = [1, 1]} : vector<8x96xbf16> to vector<8x8xbf16>
    %27 = vector.extract_strided_slice %1 {offsets = [0, 40], sizes = [8, 8], strides = [1, 1]} : vector<8x96xbf16> to vector<8x8xbf16>
    %28 = vector.extract_strided_slice %1 {offsets = [0, 72], sizes = [8, 8], strides = [1, 1]} : vector<8x96xbf16> to vector<8x8xbf16>
    %cst_10 = arith.constant dense<0.000000e+00> : vector<8x8xf32>
    %29 = tpu.matmul %26, %27, %cst_10 {dimension_numbers = #tpu.dot_dimension_numbers<[1], [1], [0], [0], [0, 0, 1, 0], [], []>} : vector<8x8xbf16>, vector<8x8xbf16>, vector<8x8xf32> -> vector<8x8xf32>
    %30 = vector.broadcast %7 : vector<1x8xf32> to vector<8x8xf32>
    %31 = arith.addf %29, %30 : vector<8x8xf32>
    %cst_11 = arith.constant dense<0xFF800000> : vector<8xf32>
    %32 = vector.multi_reduction <maximumf>, %31, %cst_11 [1] : vector<8x8xf32> to vector<8xf32>
    %33 = vector.shape_cast %32 : vector<8xf32> to vector<8x1xf32>
    %34 = vector.broadcast %33 : vector<8x1xf32> to vector<8x8xf32>
    %35 = arith.subf %31, %34 : vector<8x8xf32>
    %36 = math.exp %35 : vector<8x8xf32>
    %cst_12 = arith.constant dense<0.000000e+00> : vector<8xf32>
    %37 = vector.multi_reduction <add>, %36, %cst_12 [1] : vector<8x8xf32> to vector<8xf32>
    %38 = vector.shape_cast %37 : vector<8xf32> to vector<8x1xf32>
    %39 = tpu.reciprocal %38 {approx = true} : vector<8x1xf32> -> vector<8x1xf32>
    %40 = vector.broadcast %39 : vector<8x1xf32> to vector<8x8xf32>
    %41 = arith.mulf %36, %40 : vector<8x8xf32>
    %42 = arith.truncf %41 : vector<8x8xf32> to vector<8x8xbf16>
    %cst_13 = arith.constant dense<0.000000e+00> : vector<8x8xf32>
    %43 = tpu.matmul %42, %28, %cst_13 {dimension_numbers = #tpu.dot_dimension_numbers<[1], [0], [0], [1], [0, 0, 1, 1], [], []>} : vector<8x8xbf16>, vector<8x8xbf16>, vector<8x8xf32> -> vector<8x8xf32>
    %44 = vector.extract_strided_slice %1 {offsets = [0, 16], sizes = [8, 8], strides = [1, 1]} : vector<8x96xbf16> to vector<8x8xbf16>
    %45 = vector.extract_strided_slice %1 {offsets = [0, 48], sizes = [8, 8], strides = [1, 1]} : vector<8x96xbf16> to vector<8x8xbf16>
    %46 = vector.extract_strided_slice %1 {offsets = [0, 80], sizes = [8, 8], strides = [1, 1]} : vector<8x96xbf16> to vector<8x8xbf16>
    %cst_14 = arith.constant dense<0.000000e+00> : vector<8x8xf32>
    %47 = tpu.matmul %44, %45, %cst_14 {dimension_numbers = #tpu.dot_dimension_numbers<[1], [1], [0], [0], [0, 0, 1, 0], [], []>} : vector<8x8xbf16>, vector<8x8xbf16>, vector<8x8xf32> -> vector<8x8xf32>
    %48 = vector.broadcast %7 : vector<1x8xf32> to vector<8x8xf32>
    %49 = arith.addf %47, %48 : vector<8x8xf32>
    %cst_15 = arith.constant dense<0xFF800000> : vector<8xf32>
    %50 = vector.multi_reduction <maximumf>, %49, %cst_15 [1] : vector<8x8xf32> to vector<8xf32>
    %51 = vector.shape_cast %50 : vector<8xf32> to vector<8x1xf32>
    %52 = vector.broadcast %51 : vector<8x1xf32> to vector<8x8xf32>
    %53 = arith.subf %49, %52 : vector<8x8xf32>
    %54 = math.exp %53 : vector<8x8xf32>
    %cst_16 = arith.constant dense<0.000000e+00> : vector<8xf32>
    %55 = vector.multi_reduction <add>, %54, %cst_16 [1] : vector<8x8xf32> to vector<8xf32>
    %56 = vector.shape_cast %55 : vector<8xf32> to vector<8x1xf32>
    %57 = tpu.reciprocal %56 {approx = true} : vector<8x1xf32> -> vector<8x1xf32>
    %58 = vector.broadcast %57 : vector<8x1xf32> to vector<8x8xf32>
    %59 = arith.mulf %54, %58 : vector<8x8xf32>
    %60 = arith.truncf %59 : vector<8x8xf32> to vector<8x8xbf16>
    %cst_17 = arith.constant dense<0.000000e+00> : vector<8x8xf32>
    %61 = tpu.matmul %60, %46, %cst_17 {dimension_numbers = #tpu.dot_dimension_numbers<[1], [0], [0], [1], [0, 0, 1, 1], [], []>} : vector<8x8xbf16>, vector<8x8xbf16>, vector<8x8xf32> -> vector<8x8xf32>
    %62 = vector.extract_strided_slice %1 {offsets = [0, 24], sizes = [8, 8], strides = [1, 1]} : vector<8x96xbf16> to vector<8x8xbf16>
    %63 = vector.extract_strided_slice %1 {offsets = [0, 56], sizes = [8, 8], strides = [1, 1]} : vector<8x96xbf16> to vector<8x8xbf16>
    %64 = vector.extract_strided_slice %1 {offsets = [0, 88], sizes = [8, 8], strides = [1, 1]} : vector<8x96xbf16> to vector<8x8xbf16>
    %cst_18 = arith.constant dense<0.000000e+00> : vector<8x8xf32>
    %65 = tpu.matmul %62, %63, %cst_18 {dimension_numbers = #tpu.dot_dimension_numbers<[1], [1], [0], [0], [0, 0, 1, 0], [], []>} : vector<8x8xbf16>, vector<8x8xbf16>, vector<8x8xf32> -> vector<8x8xf32>
    %66 = vector.broadcast %7 : vector<1x8xf32> to vector<8x8xf32>
    %67 = arith.addf %65, %66 : vector<8x8xf32>
    %cst_19 = arith.constant dense<0xFF800000> : vector<8xf32>
    %68 = vector.multi_reduction <maximumf>, %67, %cst_19 [1] : vector<8x8xf32> to vector<8xf32>
    %69 = vector.shape_cast %68 : vector<8xf32> to vector<8x1xf32>
    %70 = vector.broadcast %69 : vector<8x1xf32> to vector<8x8xf32>
    %71 = arith.subf %67, %70 : vector<8x8xf32>
    %72 = math.exp %71 : vector<8x8xf32>
    %cst_20 = arith.constant dense<0.000000e+00> : vector<8xf32>
    %73 = vector.multi_reduction <add>, %72, %cst_20 [1] : vector<8x8xf32> to vector<8xf32>
    %74 = vector.shape_cast %73 : vector<8xf32> to vector<8x1xf32>
    %75 = tpu.reciprocal %74 {approx = true} : vector<8x1xf32> -> vector<8x1xf32>
    %76 = vector.broadcast %75 : vector<8x1xf32> to vector<8x8xf32>
    %77 = arith.mulf %72, %76 : vector<8x8xf32>
    %78 = arith.truncf %77 : vector<8x8xf32> to vector<8x8xbf16>
    %cst_21 = arith.constant dense<0.000000e+00> : vector<8x8xf32>
    %79 = tpu.matmul %78, %64, %cst_21 {dimension_numbers = #tpu.dot_dimension_numbers<[1], [0], [0], [1], [0, 0, 1, 1], [], []>} : vector<8x8xbf16>, vector<8x8xbf16>, vector<8x8xf32> -> vector<8x8xf32>
    %80 = tpu.concatenate %25, %43, %61, %79 in 1 : vector<8x8xf32>, vector<8x8xf32>, vector<8x8xf32>, vector<8x8xf32> -> vector<8x32xf32>
    %81 = arith.truncf %80 : vector<8x32xf32> to vector<8x32xbf16>
    %c0_22 = arith.constant 0 : index
    %c0_23 = arith.constant 0 : index
    %c0_24 = arith.constant 0 : index
    %82 = vector.load %arg3[%c0_22, %c0_23, %c0_24] : memref<1x8x32xbf16, #tpu.memory_space<vmem>>, vector<1x8x32xbf16>
    %83 = vector.shape_cast %82 : vector<1x8x32xbf16> to vector<8x32xbf16>
    %84 = vector.shape_cast %81 : vector<8x32xbf16> to vector<1x8x32xbf16>
    tpu.vector_store %arg3[%c0_22, %c0_23, %c0_24], %84 {strides = array<i32>} : memref<1x8x32xbf16, #tpu.memory_space<vmem>>, vector<1x8x32xbf16>,
    return
  }
  func.func @transform_0(%arg0: i32) -> (i32, i32, i32) {
    %c0_i32 = arith.constant 0 : i32
    %c0_i32_0 = arith.constant 0 : i32
    %c0_i32_1 = arith.constant 0 : i32
    return %arg0, %c0_i32, %c0_i32_0 : i32, i32, i32
  }
  func.func @transform_1(%arg0: i32) -> (i32, i32, i32) {
    %c0_i32 = arith.constant 0 : i32
    %c0_i32_0 = arith.constant 0 : i32
    %c0_i32_1 = arith.constant 0 : i32
    return %arg0, %c0_i32, %c0_i32_0 : i32, i32, i32
  }
  func.func @transform_2(%arg0: i32) -> (i32, i32, i32) {
    %c0_i32 = arith.constant 0 : i32
    %c0_i32_0 = arith.constant 0 : i32
    %c0_i32_1 = arith.constant 0 : i32
    return %arg0, %c0_i32, %c0_i32_0 : i32, i32, i32
  }
}

module attributes {stable_mosaic.version = 11 : i64} {
  func.func @_linear_res_ln_kernel(%arg0: i32, %arg1: memref<16x32xbf16, #tpu.memory_space<vmem>>, %arg2: memref<32x32xbf16, #tpu.memory_space<vmem>>, %arg3: memref<1x32xf32, #tpu.memory_space<vmem>>, %arg4: memref<16x32xbf16, #tpu.memory_space<vmem>>, %arg5: memref<1x32xf32, #tpu.memory_space<vmem>>, %arg6: memref<1x32xf32, #tpu.memory_space<vmem>>, %arg7: memref<16x32xbf16, #tpu.memory_space<vmem>>) attributes {dimension_semantics = [#tpu.dimension_semantics<parallel>], iteration_bounds = array<i64: 1>, scalar_prefetch = 0 : i64, scratch_operands = 0 : i64, tpu.core_type = #tpu.core_type<tc>, window_params = [{transform_indices = @transform_0, window_bounds = array<i64: 16, 32>}, {pipeline_mode = #tpu.pipeline_mode<synchronous>, transform_indices = @transform_1, window_bounds = array<i64: 32, 32>}, {pipeline_mode = #tpu.pipeline_mode<synchronous>, transform_indices = @transform_2, window_bounds = array<i64: 1, 32>}, {transform_indices = @transform_3, window_bounds = array<i64: 16, 32>}, {pipeline_mode = #tpu.pipeline_mode<synchronous>, transform_indices = @transform_4, window_bounds = array<i64: 1, 32>}, {pipeline_mode = #tpu.pipeline_mode<synchronous>, transform_indices = @transform_5, window_bounds = array<i64: 1, 32>}, {transform_indices = @transform_6, window_bounds = array<i64: 16, 32>}]} {
    %c0 = arith.constant 0 : index
    %c0_0 = arith.constant 0 : index
    %0 = vector.load %arg1[%c0, %c0_0] : memref<16x32xbf16, #tpu.memory_space<vmem>>, vector<16x32xbf16>
    %c0_1 = arith.constant 0 : index
    %c0_2 = arith.constant 0 : index
    %1 = vector.load %arg2[%c0_1, %c0_2] : memref<32x32xbf16, #tpu.memory_space<vmem>>, vector<32x32xbf16>
    %cst = arith.constant dense<0.000000e+00> : vector<16x32xf32>
    %2 = tpu.matmul %0, %1, %cst {dimension_numbers = #tpu.dot_dimension_numbers<[1], [0], [0], [1], [0, 0, 1, 1], [], []>} : vector<16x32xbf16>, vector<32x32xbf16>, vector<16x32xf32> -> vector<16x32xf32>
    %c0_3 = arith.constant 0 : index
    %c0_4 = arith.constant 0 : index
    %3 = vector.load %arg3[%c0_3, %c0_4] : memref<1x32xf32, #tpu.memory_space<vmem>>, vector<1x32xf32>
    %4 = vector.broadcast %3 : vector<1x32xf32> to vector<16x32xf32>
    %5 = arith.addf %2, %4 : vector<16x32xf32>
    %c0_5 = arith.constant 0 : index
    %c0_6 = arith.constant 0 : index
    %6 = vector.load %arg4[%c0_5, %c0_6] : memref<16x32xbf16, #tpu.memory_space<vmem>>, vector<16x32xbf16>
    %7 = arith.extf %6 : vector<16x32xbf16> to vector<16x32xf32>
    %8 = arith.addf %5, %7 : vector<16x32xf32>
    %c0_7 = arith.constant 0 : index
    %c0_8 = arith.constant 0 : index
    %9 = vector.load %arg5[%c0_7, %c0_8] : memref<1x32xf32, #tpu.memory_space<vmem>>, vector<1x32xf32>
    %c0_9 = arith.constant 0 : index
    %c0_10 = arith.constant 0 : index
    %10 = vector.load %arg6[%c0_9, %c0_10] : memref<1x32xf32, #tpu.memory_space<vmem>>, vector<1x32xf32>
    %cst_11 = arith.constant dense<0.000000e+00> : vector<16xf32>
    %11 = vector.multi_reduction <add>, %8, %cst_11 [1] : vector<16x32xf32> to vector<16xf32>
    %12 = vector.shape_cast %11 : vector<16xf32> to vector<16x1xf32>
    %cst_12 = arith.constant 3.200000e+01 : f32
    %13 = vector.broadcast %cst_12 : f32 to vector<16x1xf32>
    %14 = arith.divf %12, %13 : vector<16x1xf32>
    %15 = vector.broadcast %14 : vector<16x1xf32> to vector<16x32xf32>
    %16 = arith.subf %8, %15 : vector<16x32xf32>
    %17 = vector.broadcast %14 : vector<16x1xf32> to vector<16x32xf32>
    %18 = arith.subf %8, %17 : vector<16x32xf32>
    %19 = arith.mulf %16, %18 : vector<16x32xf32>
    %cst_13 = arith.constant dense<0.000000e+00> : vector<16xf32>
    %20 = vector.multi_reduction <add>, %19, %cst_13 [1] : vector<16x32xf32> to vector<16xf32>
    %21 = vector.shape_cast %20 : vector<16xf32> to vector<16x1xf32>
    %cst_14 = arith.constant 3.200000e+01 : f32
    %22 = vector.broadcast %cst_14 : f32 to vector<16x1xf32>
    %23 = arith.divf %21, %22 : vector<16x1xf32>
    %cst_15 = arith.constant 9.99999974E-6 : f32
    %24 = vector.broadcast %cst_15 : f32 to vector<16x1xf32>
    %25 = arith.addf %23, %24 : vector<16x1xf32>
    %26 = math.rsqrt %25 : vector<16x1xf32>
    %27 = vector.broadcast %14 : vector<16x1xf32> to vector<16x32xf32>
    %28 = arith.subf %8, %27 : vector<16x32xf32>
    %29 = vector.broadcast %26 : vector<16x1xf32> to vector<16x32xf32>
    %30 = arith.mulf %28, %29 : vector<16x32xf32>
    %31 = vector.broadcast %9 : vector<1x32xf32> to vector<16x32xf32>
    %32 = arith.mulf %30, %31 : vector<16x32xf32>
    %33 = vector.broadcast %10 : vector<1x32xf32> to vector<16x32xf32>
    %34 = arith.addf %32, %33 : vector<16x32xf32>
    %35 = arith.truncf %34 : vector<16x32xf32> to vector<16x32xbf16>
    %c0_16 = arith.constant 0 : index
    %c0_17 = arith.constant 0 : index
    %36 = vector.load %arg7[%c0_16, %c0_17] : memref<16x32xbf16, #tpu.memory_space<vmem>>, vector<16x32xbf16>
    tpu.vector_store %arg7[%c0_16, %c0_17], %35 {strides = array<i32>} : memref<16x32xbf16, #tpu.memory_space<vmem>>, vector<16x32xbf16>,
    return
  }
  func.func @transform_0(%arg0: i32) -> (i32, i32) {
    %c0_i32 = arith.constant 0 : i32
    %c0_i32_0 = arith.constant 0 : i32
    return %arg0, %c0_i32 : i32, i32
  }
  func.func @transform_1(%arg0: i32) -> (i32, i32) {
    %c0_i32 = arith.constant 0 : i32
    %c0_i32_0 = arith.constant 0 : i32
    %c0_i32_1 = arith.constant 0 : i32
    return %c0_i32, %c0_i32_0 : i32, i32
  }
  func.func @transform_2(%arg0: i32) -> (i32, i32) {
    %c0_i32 = arith.constant 0 : i32
    %c0_i32_0 = arith.constant 0 : i32
    %c0_i32_1 = arith.constant 0 : i32
    return %c0_i32, %c0_i32_0 : i32, i32
  }
  func.func @transform_3(%arg0: i32) -> (i32, i32) {
    %c0_i32 = arith.constant 0 : i32
    %c0_i32_0 = arith.constant 0 : i32
    return %arg0, %c0_i32 : i32, i32
  }
  func.func @transform_4(%arg0: i32) -> (i32, i32) {
    %c0_i32 = arith.constant 0 : i32
    %c0_i32_0 = arith.constant 0 : i32
    %c0_i32_1 = arith.constant 0 : i32
    return %c0_i32, %c0_i32_0 : i32, i32
  }
  func.func @transform_5(%arg0: i32) -> (i32, i32) {
    %c0_i32 = arith.constant 0 : i32
    %c0_i32_0 = arith.constant 0 : i32
    %c0_i32_1 = arith.constant 0 : i32
    return %c0_i32, %c0_i32_0 : i32, i32
  }
  func.func @transform_6(%arg0: i32) -> (i32, i32) {
    %c0_i32 = arith.constant 0 : i32
    %c0_i32_0 = arith.constant 0 : i32
    return %arg0, %c0_i32 : i32, i32
  }
}

module attributes {stable_mosaic.version = 11 : i64} {
  func.func @_ffn_res_ln_kernel(%arg0: i32, %arg1: memref<16x32xbf16, #tpu.memory_space<vmem>>, %arg2: memref<32x64xbf16, #tpu.memory_space<vmem>>, %arg3: memref<1x64xf32, #tpu.memory_space<vmem>>, %arg4: memref<64x32xbf16, #tpu.memory_space<vmem>>, %arg5: memref<1x32xf32, #tpu.memory_space<vmem>>, %arg6: memref<1x32xf32, #tpu.memory_space<vmem>>, %arg7: memref<1x32xf32, #tpu.memory_space<vmem>>, %arg8: memref<16x32xbf16, #tpu.memory_space<vmem>>, %arg9: memref<16x64xbf16, #tpu.memory_space<vmem>>) attributes {dimension_semantics = [#tpu.dimension_semantics<parallel>], iteration_bounds = array<i64: 1>, scalar_prefetch = 0 : i64, scratch_operands = 1 : i64, tpu.core_type = #tpu.core_type<tc>, window_params = [{transform_indices = @transform_0, window_bounds = array<i64: 16, 32>}, {pipeline_mode = #tpu.pipeline_mode<synchronous>, transform_indices = @transform_1, window_bounds = array<i64: 32, 64>}, {pipeline_mode = #tpu.pipeline_mode<synchronous>, transform_indices = @transform_2, window_bounds = array<i64: 1, 64>}, {pipeline_mode = #tpu.pipeline_mode<synchronous>, transform_indices = @transform_3, window_bounds = array<i64: 64, 32>}, {pipeline_mode = #tpu.pipeline_mode<synchronous>, transform_indices = @transform_4, window_bounds = array<i64: 1, 32>}, {pipeline_mode = #tpu.pipeline_mode<synchronous>, transform_indices = @transform_5, window_bounds = array<i64: 1, 32>}, {pipeline_mode = #tpu.pipeline_mode<synchronous>, transform_indices = @transform_6, window_bounds = array<i64: 1, 32>}, {transform_indices = @transform_7, window_bounds = array<i64: 16, 32>}]} {
    %c0 = arith.constant 0 : index
    %c0_0 = arith.constant 0 : index
    %0 = vector.load %arg1[%c0, %c0_0] : memref<16x32xbf16, #tpu.memory_space<vmem>>, vector<16x32xbf16>
    %c0_1 = arith.constant 0 : index
    %c0_2 = arith.constant 0 : index
    %1 = vector.load %arg2[%c0_1, %c0_2] : memref<32x64xbf16, #tpu.memory_space<vmem>>, vector<32x64xbf16>
    %cst = arith.constant dense<0.000000e+00> : vector<16x64xf32>
    %2 = tpu.matmul %0, %1, %cst {dimension_numbers = #tpu.dot_dimension_numbers<[1], [0], [0], [1], [0, 0, 1, 1], [], []>} : vector<16x32xbf16>, vector<32x64xbf16>, vector<16x64xf32> -> vector<16x64xf32>
    %c0_3 = arith.constant 0 : index
    %c0_4 = arith.constant 0 : index
    %3 = vector.load %arg3[%c0_3, %c0_4] : memref<1x64xf32, #tpu.memory_space<vmem>>, vector<1x64xf32>
    %4 = vector.broadcast %3 : vector<1x64xf32> to vector<16x64xf32>
    %5 = arith.addf %2, %4 : vector<16x64xf32>
    %cst_5 = arith.constant 5.000000e-01 : f32
    %6 = vector.broadcast %cst_5 : f32 to vector<16x64xf32>
    %7 = arith.mulf %6, %5 : vector<16x64xf32>
    %cst_6 = arith.constant 4.471500e-02 : f32
    %8 = vector.broadcast %cst_6 : f32 to vector<16x64xf32>
    %9 = arith.mulf %8, %5 : vector<16x64xf32>
    %10 = arith.mulf %9, %5 : vector<16x64xf32>
    %11 = arith.mulf %10, %5 : vector<16x64xf32>
    %12 = arith.addf %5, %11 : vector<16x64xf32>
    %cst_7 = arith.constant 0.797884583 : f32
    %13 = vector.broadcast %cst_7 : f32 to vector<16x64xf32>
    %14 = arith.mulf %13, %12 : vector<16x64xf32>
    %15 = math.tanh %14 : vector<16x64xf32>
    %cst_8 = arith.constant 1.000000e+00 : f32
    %16 = vector.broadcast %cst_8 : f32 to vector<16x64xf32>
    %17 = arith.addf %16, %15 : vector<16x64xf32>
    %18 = arith.mulf %7, %17 : vector<16x64xf32>
    %19 = arith.truncf %18 : vector<16x64xf32> to vector<16x64xbf16>
    %c0_9 = arith.constant 0 : index
    %c0_10 = arith.constant 0 : index
    %20 = vector.load %arg9[%c0_9, %c0_10] : memref<16x64xbf16, #tpu.memory_space<vmem>>, vector<16x64xbf16>
    tpu.vector_store %arg9[%c0_9, %c0_10], %19 {strides = array<i32>} : memref<16x64xbf16, #tpu.memory_space<vmem>>, vector<16x64xbf16>,
    %c0_11 = arith.constant 0 : index
    %c0_12 = arith.constant 0 : index
    %21 = vector.load %arg9[%c0_11, %c0_12] : memref<16x64xbf16, #tpu.memory_space<vmem>>, vector<16x64xbf16>
    %c0_13 = arith.constant 0 : index
    %c0_14 = arith.constant 0 : index
    %22 = vector.load %arg4[%c0_13, %c0_14] : memref<64x32xbf16, #tpu.memory_space<vmem>>, vector<64x32xbf16>
    %cst_15 = arith.constant dense<0.000000e+00> : vector<16x32xf32>
    %23 = tpu.matmul %21, %22, %cst_15 {dimension_numbers = #tpu.dot_dimension_numbers<[1], [0], [0], [1], [0, 0, 1, 1], [], []>} : vector<16x64xbf16>, vector<64x32xbf16>, vector<16x32xf32> -> vector<16x32xf32>
    %c0_16 = arith.constant 0 : index
    %c0_17 = arith.constant 0 : index
    %24 = vector.load %arg5[%c0_16, %c0_17] : memref<1x32xf32, #tpu.memory_space<vmem>>, vector<1x32xf32>
    %25 = vector.broadcast %24 : vector<1x32xf32> to vector<16x32xf32>
    %26 = arith.addf %23, %25 : vector<16x32xf32>
    %c0_18 = arith.constant 0 : index
    %c0_19 = arith.constant 0 : index
    %27 = vector.load %arg1[%c0_18, %c0_19] : memref<16x32xbf16, #tpu.memory_space<vmem>>, vector<16x32xbf16>
    %28 = arith.extf %27 : vector<16x32xbf16> to vector<16x32xf32>
    %29 = arith.addf %26, %28 : vector<16x32xf32>
    %c0_20 = arith.constant 0 : index
    %c0_21 = arith.constant 0 : index
    %30 = vector.load %arg6[%c0_20, %c0_21] : memref<1x32xf32, #tpu.memory_space<vmem>>, vector<1x32xf32>
    %c0_22 = arith.constant 0 : index
    %c0_23 = arith.constant 0 : index
    %31 = vector.load %arg7[%c0_22, %c0_23] : memref<1x32xf32, #tpu.memory_space<vmem>>, vector<1x32xf32>
    %cst_24 = arith.constant dense<0.000000e+00> : vector<16xf32>
    %32 = vector.multi_reduction <add>, %29, %cst_24 [1] : vector<16x32xf32> to vector<16xf32>
    %33 = vector.shape_cast %32 : vector<16xf32> to vector<16x1xf32>
    %cst_25 = arith.constant 3.200000e+01 : f32
    %34 = vector.broadcast %cst_25 : f32 to vector<16x1xf32>
    %35 = arith.divf %33, %34 : vector<16x1xf32>
    %36 = vector.broadcast %35 : vector<16x1xf32> to vector<16x32xf32>
    %37 = arith.subf %29, %36 : vector<16x32xf32>
    %38 = vector.broadcast %35 : vector<16x1xf32> to vector<16x32xf32>
    %39 = arith.subf %29, %38 : vector<16x32xf32>
    %40 = arith.mulf %37, %39 : vector<16x32xf32>
    %cst_26 = arith.constant dense<0.000000e+00> : vector<16xf32>
    %41 = vector.multi_reduction <add>, %40, %cst_26 [1] : vector<16x32xf32> to vector<16xf32>
    %42 = vector.shape_cast %41 : vector<16xf32> to vector<16x1xf32>
    %cst_27 = arith.constant 3.200000e+01 : f32
    %43 = vector.broadcast %cst_27 : f32 to vector<16x1xf32>
    %44 = arith.divf %42, %43 : vector<16x1xf32>
    %cst_28 = arith.constant 9.99999974E-6 : f32
    %45 = vector.broadcast %cst_28 : f32 to vector<16x1xf32>
    %46 = arith.addf %44, %45 : vector<16x1xf32>
    %47 = math.rsqrt %46 : vector<16x1xf32>
    %48 = vector.broadcast %35 : vector<16x1xf32> to vector<16x32xf32>
    %49 = arith.subf %29, %48 : vector<16x32xf32>
    %50 = vector.broadcast %47 : vector<16x1xf32> to vector<16x32xf32>
    %51 = arith.mulf %49, %50 : vector<16x32xf32>
    %52 = vector.broadcast %30 : vector<1x32xf32> to vector<16x32xf32>
    %53 = arith.mulf %51, %52 : vector<16x32xf32>
    %54 = vector.broadcast %31 : vector<1x32xf32> to vector<16x32xf32>
    %55 = arith.addf %53, %54 : vector<16x32xf32>
    %56 = arith.truncf %55 : vector<16x32xf32> to vector<16x32xbf16>
    %c0_29 = arith.constant 0 : index
    %c0_30 = arith.constant 0 : index
    %57 = vector.load %arg8[%c0_29, %c0_30] : memref<16x32xbf16, #tpu.memory_space<vmem>>, vector<16x32xbf16>
    tpu.vector_store %arg8[%c0_29, %c0_30], %56 {strides = array<i32>} : memref<16x32xbf16, #tpu.memory_space<vmem>>, vector<16x32xbf16>,
    return
  }
  func.func @transform_0(%arg0: i32) -> (i32, i32) {
    %c0_i32 = arith.constant 0 : i32
    %c0_i32_0 = arith.constant 0 : i32
    return %arg0, %c0_i32 : i32, i32
  }
  func.func @transform_1(%arg0: i32) -> (i32, i32) {
    %c0_i32 = arith.constant 0 : i32
    %c0_i32_0 = arith.constant 0 : i32
    %c0_i32_1 = arith.constant 0 : i32
    return %c0_i32, %c0_i32_0 : i32, i32
  }
  func.func @transform_2(%arg0: i32) -> (i32, i32) {
    %c0_i32 = arith.constant 0 : i32
    %c0_i32_0 = arith.constant 0 : i32
    %c0_i32_1 = arith.constant 0 : i32
    return %c0_i32, %c0_i32_0 : i32, i32
  }
  func.func @transform_3(%arg0: i32) -> (i32, i32) {
    %c0_i32 = arith.constant 0 : i32
    %c0_i32_0 = arith.constant 0 : i32
    %c0_i32_1 = arith.constant 0 : i32
    return %c0_i32, %c0_i32_0 : i32, i32
  }
  func.func @transform_4(%arg0: i32) -> (i32, i32) {
    %c0_i32 = arith.constant 0 : i32
    %c0_i32_0 = arith.constant 0 : i32
    %c0_i32_1 = arith.constant 0 : i32
    return %c0_i32, %c0_i32_0 : i32, i32
  }
  func.func @transform_5(%arg0: i32) -> (i32, i32) {
    %c0_i32 = arith.constant 0 : i32
    %c0_i32_0 = arith.constant 0 : i32
    %c0_i32_1 = arith.constant 0 : i32
    return %c0_i32, %c0_i32_0 : i32, i32
  }
  func.func @transform_6(%arg0: i32) -> (i32, i32) {
    %c0_i32 = arith.constant 0 : i32
    %c0_i32_0 = arith.constant 0 : i32
    %c0_i32_1 = arith.constant 0 : i32
    return %c0_i32, %c0_i32_0 : i32, i32
  }
  func.func @transform_7(%arg0: i32) -> (i32, i32) {
    %c0_i32 = arith.constant 0 : i32
    %c0_i32_0 = arith.constant 0 : i32
    return %arg0, %c0_i32 : i32, i32
  }
}

module attributes {stable_mosaic.version = 11 : i64} {
  func.func @_head_kernel(%arg0: i32, %arg1: memref<2x32xbf16, #tpu.memory_space<vmem>>, %arg2: memref<32x32xbf16, #tpu.memory_space<vmem>>, %arg3: memref<1x32xf32, #tpu.memory_space<vmem>>, %arg4: memref<32x32xbf16, #tpu.memory_space<vmem>>, %arg5: memref<1x32xf32, #tpu.memory_space<vmem>>, %arg6: memref<32x16xbf16, #tpu.memory_space<vmem>>, %arg7: memref<1x16xf32, #tpu.memory_space<vmem>>, %arg8: memref<2x32xf32, #tpu.memory_space<vmem>>, %arg9: memref<2x16xf32, #tpu.memory_space<vmem>>) attributes {dimension_semantics = [#tpu.dimension_semantics<arbitrary>], iteration_bounds = array<i64: 1>, scalar_prefetch = 0 : i64, scratch_operands = 0 : i64, tpu.core_type = #tpu.core_type<tc>, window_params = [{pipeline_mode = #tpu.pipeline_mode<synchronous>, transform_indices = @transform_0, window_bounds = array<i64: 2, 32>}, {pipeline_mode = #tpu.pipeline_mode<synchronous>, transform_indices = @transform_1, window_bounds = array<i64: 32, 32>}, {pipeline_mode = #tpu.pipeline_mode<synchronous>, transform_indices = @transform_2, window_bounds = array<i64: 1, 32>}, {pipeline_mode = #tpu.pipeline_mode<synchronous>, transform_indices = @transform_3, window_bounds = array<i64: 32, 32>}, {pipeline_mode = #tpu.pipeline_mode<synchronous>, transform_indices = @transform_4, window_bounds = array<i64: 1, 32>}, {pipeline_mode = #tpu.pipeline_mode<synchronous>, transform_indices = @transform_5, window_bounds = array<i64: 32, 16>}, {pipeline_mode = #tpu.pipeline_mode<synchronous>, transform_indices = @transform_6, window_bounds = array<i64: 1, 16>}, {pipeline_mode = #tpu.pipeline_mode<synchronous>, transform_indices = @transform_7, window_bounds = array<i64: 2, 32>}, {pipeline_mode = #tpu.pipeline_mode<synchronous>, transform_indices = @transform_8, window_bounds = array<i64: 2, 16>}]} {
    %c0 = arith.constant 0 : index
    %c0_0 = arith.constant 0 : index
    %0 = vector.load %arg1[%c0, %c0_0] : memref<2x32xbf16, #tpu.memory_space<vmem>>, vector<2x32xbf16>
    %c0_1 = arith.constant 0 : index
    %c0_2 = arith.constant 0 : index
    %1 = vector.load %arg2[%c0_1, %c0_2] : memref<32x32xbf16, #tpu.memory_space<vmem>>, vector<32x32xbf16>
    %cst = arith.constant dense<0.000000e+00> : vector<2x32xf32>
    %2 = tpu.matmul %0, %1, %cst {dimension_numbers = #tpu.dot_dimension_numbers<[1], [0], [0], [1], [0, 0, 1, 1], [], []>} : vector<2x32xbf16>, vector<32x32xbf16>, vector<2x32xf32> -> vector<2x32xf32>
    %c0_3 = arith.constant 0 : index
    %c0_4 = arith.constant 0 : index
    %3 = vector.load %arg3[%c0_3, %c0_4] : memref<1x32xf32, #tpu.memory_space<vmem>>, vector<1x32xf32>
    %4 = vector.broadcast %3 : vector<1x32xf32> to vector<2x32xf32>
    %5 = arith.addf %2, %4 : vector<2x32xf32>
    %6 = math.tanh %5 : vector<2x32xf32>
    %c0_5 = arith.constant 0 : index
    %c0_6 = arith.constant 0 : index
    %7 = vector.load %arg8[%c0_5, %c0_6] : memref<2x32xf32, #tpu.memory_space<vmem>>, vector<2x32xf32>
    tpu.vector_store %arg8[%c0_5, %c0_6], %6 {strides = array<i32>} : memref<2x32xf32, #tpu.memory_space<vmem>>, vector<2x32xf32>,
    %8 = arith.truncf %6 : vector<2x32xf32> to vector<2x32xbf16>
    %c0_7 = arith.constant 0 : index
    %c0_8 = arith.constant 0 : index
    %9 = vector.load %arg4[%c0_7, %c0_8] : memref<32x32xbf16, #tpu.memory_space<vmem>>, vector<32x32xbf16>
    %cst_9 = arith.constant dense<0.000000e+00> : vector<2x32xf32>
    %10 = tpu.matmul %8, %9, %cst_9 {dimension_numbers = #tpu.dot_dimension_numbers<[1], [0], [0], [1], [0, 0, 1, 1], [], []>} : vector<2x32xbf16>, vector<32x32xbf16>, vector<2x32xf32> -> vector<2x32xf32>
    %c0_10 = arith.constant 0 : index
    %c0_11 = arith.constant 0 : index
    %11 = vector.load %arg5[%c0_10, %c0_11] : memref<1x32xf32, #tpu.memory_space<vmem>>, vector<1x32xf32>
    %12 = vector.broadcast %11 : vector<1x32xf32> to vector<2x32xf32>
    %13 = arith.addf %10, %12 : vector<2x32xf32>
    %cst_12 = arith.constant 0.000000e+00 : f32
    %14 = vector.broadcast %cst_12 : f32 to vector<2x32xf32>
    %15 = arith.maximumf %13, %14 : vector<2x32xf32>
    %16 = arith.truncf %15 : vector<2x32xf32> to vector<2x32xbf16>
    %c0_13 = arith.constant 0 : index
    %c0_14 = arith.constant 0 : index
    %17 = vector.load %arg6[%c0_13, %c0_14] : memref<32x16xbf16, #tpu.memory_space<vmem>>, vector<32x16xbf16>
    %cst_15 = arith.constant dense<0.000000e+00> : vector<2x16xf32>
    %18 = tpu.matmul %16, %17, %cst_15 {dimension_numbers = #tpu.dot_dimension_numbers<[1], [0], [0], [1], [0, 0, 1, 1], [], []>} : vector<2x32xbf16>, vector<32x16xbf16>, vector<2x16xf32> -> vector<2x16xf32>
    %c0_16 = arith.constant 0 : index
    %c0_17 = arith.constant 0 : index
    %19 = vector.load %arg7[%c0_16, %c0_17] : memref<1x16xf32, #tpu.memory_space<vmem>>, vector<1x16xf32>
    %20 = vector.broadcast %19 : vector<1x16xf32> to vector<2x16xf32>
    %21 = arith.addf %18, %20 : vector<2x16xf32>
    %c0_18 = arith.constant 0 : index
    %c0_19 = arith.constant 0 : index
    %22 = vector.load %arg9[%c0_18, %c0_19] : memref<2x16xf32, #tpu.memory_space<vmem>>, vector<2x16xf32>
    tpu.vector_store %arg9[%c0_18, %c0_19], %21 {strides = array<i32>} : memref<2x16xf32, #tpu.memory_space<vmem>>, vector<2x16xf32>,
    return
  }
  func.func @transform_0(%arg0: i32) -> (i32, i32) {
    %c0_i32 = arith.constant 0 : i32
    %c0_i32_0 = arith.constant 0 : i32
    %c0_i32_1 = arith.constant 0 : i32
    return %c0_i32, %c0_i32_0 : i32, i32
  }
  func.func @transform_1(%arg0: i32) -> (i32, i32) {
    %c0_i32 = arith.constant 0 : i32
    %c0_i32_0 = arith.constant 0 : i32
    %c0_i32_1 = arith.constant 0 : i32
    return %c0_i32, %c0_i32_0 : i32, i32
  }
  func.func @transform_2(%arg0: i32) -> (i32, i32) {
    %c0_i32 = arith.constant 0 : i32
    %c0_i32_0 = arith.constant 0 : i32
    %c0_i32_1 = arith.constant 0 : i32
    return %c0_i32, %c0_i32_0 : i32, i32
  }
  func.func @transform_3(%arg0: i32) -> (i32, i32) {
    %c0_i32 = arith.constant 0 : i32
    %c0_i32_0 = arith.constant 0 : i32
    %c0_i32_1 = arith.constant 0 : i32
    return %c0_i32, %c0_i32_0 : i32, i32
  }
  func.func @transform_4(%arg0: i32) -> (i32, i32) {
    %c0_i32 = arith.constant 0 : i32
    %c0_i32_0 = arith.constant 0 : i32
    %c0_i32_1 = arith.constant 0 : i32
    return %c0_i32, %c0_i32_0 : i32, i32
  }
  func.func @transform_5(%arg0: i32) -> (i32, i32) {
    %c0_i32 = arith.constant 0 : i32
    %c0_i32_0 = arith.constant 0 : i32
    %c0_i32_1 = arith.constant 0 : i32
    return %c0_i32, %c0_i32_0 : i32, i32
  }
  func.func @transform_6(%arg0: i32) -> (i32, i32) {
    %c0_i32 = arith.constant 0 : i32
    %c0_i32_0 = arith.constant 0 : i32
    %c0_i32_1 = arith.constant 0 : i32
    return %c0_i32, %c0_i32_0 : i32, i32
  }
  func.func @transform_7(%arg0: i32) -> (i32, i32) {
    %c0_i32 = arith.constant 0 : i32
    %c0_i32_0 = arith.constant 0 : i32
    %c0_i32_1 = arith.constant 0 : i32
    return %c0_i32, %c0_i32_0 : i32, i32
  }
  func.func @transform_8(%arg0: i32) -> (i32, i32) {
    %c0_i32 = arith.constant 0 : i32
    %c0_i32_0 = arith.constant 0 : i32
    %c0_i32_1 = arith.constant 0 : i32
    return %c0_i32, %c0_i32_0 : i32, i32
  }
}

</mosaic_0001>

<llo_original>
// kernel: _lambda_.10
$region0: #{_lambda_.10}
  #allocation0 [shape = 'u32[]', space=smem, size = 0x4, offset = 0x4, fixed_abs, tag = 'smem constant byte address 0x4 - core index']
  #allocation1 [shape = 'u32[72,128]{1,0:T(1,128)}', space=vmem, size = 0x9000, scoped, tag = 'internal scratch']
  %s0 = inlined_call_operand.vmem [shape: f32[16,32], index: 0, kind: input, shape index: {}]
  %s1 = inlined_call_operand.vmem [shape: f32[1,32], index: 1, kind: input, shape index: {}]
  %s2 = inlined_call_operand.vmem [shape: f32[1,32], index: 2, kind: input, shape index: {}]
  %s3 = inlined_call_operand.vmem [shape: bf16[16,32], index: 3, kind: output, shape index: {}]
  %s4 = sld [smem:[#allocation0]]
  $region22: #{_lambda_.10} parent=0
    _
  %s6 = ssub.s32 1, %s4
  %s7 = scalar_select 0, %s6, %s4
  // Predicated region
  $region2: #{_lambda_.10} parent=0 // pred_check
    _
  $region3: #{_lambda_.10} parent=0 // pred_check_branch
    %9 = sbr.rel (0) target = $region5
  $region4: #{_lambda_.10} parent=0 // pred_region
    _
  $region5: #{_lambda_.10} parent=0 // pred_fallthru
    _
  // Predicated region
  $region6: #{_lambda_.10} parent=0 // pred_check
    _
  $region7: #{_lambda_.10} parent=0 // pred_check_branch
    %11 = sbr.rel (0) target = $region9
  $region8: #{_lambda_.10} parent=0 // pred_region
    _
  $region9: #{_lambda_.10} parent=0 // pred_fallthru
    _
  // Predicated region
  $region10: #{_lambda_.10} parent=0 // pred_check
    _
  $region11: #{_lambda_.10} parent=0 // pred_check_branch
    %13 = sbr.rel (0) target = $region13
  $region12: #{_lambda_.10} parent=0 // pred_region
    _
  $region13: #{_lambda_.10} parent=0 // pred_fallthru
    _
  %v14 = vld [vmem:[%s0] sm:$0xff]
  %v15 = vld [vmem:[%s0 + $0x8] sm:$0xff]
  %v16 = vld [vmem:[%s1] sm:$0x1]
  %v17 = vld [vmem:[%s2] sm:$0x1]
  %vm18 = vcmask 261120
  %v19 = vsel %vm18, %v14, 0.0
  %20 = vadd.xlane.f32.xlu0 %v19
  %v21 = vpop.xlane.xlu0 %20
  %v22 = vsel %vm18, %v15, 0.0
  %23 = vadd.xlane.f32.xlu0 %v22
  %v24 = vpop.xlane.xlu0 %23
  %v25 = vrcp.pop 32.0
  %v26 = vmul.f32 32.0, %v25
  %v27 = vsub.f32 1.0, %v26
  %v28 = vmul.f32 %v25, %v27
  %v29 = vadd.f32 %v25, %v28
  %vm30 = vweird.f32 %v25
  %v31 = vsel %vm30, %v25, %v29
  %v32 = vmul.f32 %v21, %v31
  %v33 = vmul.f32 %v24, %v31
  %v34 = vsub.f32 %v14, %v32
  %v35 = vsub.f32 %v15, %v33
  %v36 = vmul.f32 %v34, %v34
  %v37 = vmul.f32 %v35, %v35
  %v38 = vsel %vm18, %v36, 0.0
  %39 = vadd.xlane.f32.xlu0 %v38
  %v40 = vpop.xlane.xlu0 %39
  %v41 = vsel %vm18, %v37, 0.0
  %42 = vadd.xlane.f32.xlu0 %v41
  %v43 = vpop.xlane.xlu0 %42
  %v44 = vmul.f32 %v40, %v31
  %v45 = vmul.f32 %v43, %v31
  %v46 = vadd.f32 %v44, 1e-05
  %v47 = vadd.f32 %v45, 1e-05
  %v48 = vrsqrt.pop %v46
  %v49 = vmul.f32 %v48, %v46
  %v50 = vmul.f32 %v49, %v48
  %v51 = vmul.f32 0.5, %v50
  %v52 = vsub.f32 1.5, %v51
  %v53 = vmul.f32 %v48, %v52
  %vm54 = vweird.f32 %v46
  %vm55 = vweird.f32 %v48
  %vm56 = vmor %vm54, %vm55
  %v57 = vsel %vm56, %v48, %v53
  %v58 = vrsqrt.pop %v47
  %v59 = vmul.f32 %v58, %v47
  %v60 = vmul.f32 %v59, %v58
  %v61 = vmul.f32 0.5, %v60
  %v62 = vsub.f32 1.5, %v61
  %v63 = vmul.f32 %v58, %v62
  %vm64 = vweird.f32 %v47
  %vm65 = vweird.f32 %v58
  %vm66 = vmor %vm64, %vm65
  %v67 = vsel %vm66, %v58, %v63
  %v68 = vmul.f32 %v34, %v57
  %v69 = vmul.f32 %v35, %v67
  %v71 = vperm.slane %v16, 0
  %v73 = vmul.f32 %v68, %v71
  %v74 = vmul.f32 %v69, %v71
  %v76 = vperm.slane %v17, 0
  %v78 = vadd.f32 %v73, %v76
  %v79 = vadd.f32 %v74, %v76
  %v80 = vpack.c.bf16 %v78, %v78
  %v81 = vpack.c.bf16 %v79, %v79
  %vm82 = vcmask 257024
  %83 = vst.msk [vmem:[%s3] sm:$0xf] %vm82, %v80
  %84 = vst.msk [vmem:[%s3 + $0x4] sm:$0xf] %vm82, %v81
  // Predicated region
  $region14: #{_lambda_.10} parent=0 // pred_check
    _
  $region15: #{_lambda_.10} parent=0 // pred_check_branch
    %86 = sbr.rel (0) target = $region17
  $region16: #{_lambda_.10} parent=0 // pred_region
    _
  $region17: #{_lambda_.10} parent=0 // pred_fallthru
    _
  // Predicated region
  $region18: #{_lambda_.10} parent=0 // pred_check
    _
  $region19: #{_lambda_.10} parent=0 // pred_check_branch
    %88 = sbr.rel (0) target = $region21
  $region20: #{_lambda_.10} parent=0 // pred_region
    _
  $region21: #{_lambda_.10} parent=0 // pred_fallthru
    _

// kernel: _lambda_.11
$region0: #{_lambda_.11}
  #allocation0 [shape = 'u32[]', space=smem, size = 0x4, offset = 0x4, fixed_abs, tag = 'smem constant byte address 0x4 - core index']
  #allocation1 [shape = 'u32[72,128]{1,0:T(1,128)}', space=vmem, size = 0x9000, scoped, tag = 'internal scratch']
  %s0 = inlined_call_operand.vmem [shape: bf16[16,32], index: 0, kind: input, shape index: {}]
  %s1 = inlined_call_operand.vmem [shape: bf16[32,96], index: 1, kind: input, shape index: {}]
  %s2 = inlined_call_operand.vmem [shape: f32[1,96], index: 2, kind: input, shape index: {}]
  %s3 = inlined_call_operand.vmem [shape: bf16[16,96], index: 3, kind: output, shape index: {}]
  %s4 = sld [smem:[#allocation0]]
  $region22: #{_lambda_.11} parent=0
    _
  %s6 = ssub.s32 1, %s4
  %s7 = scalar_select 0, %s6, %s4
  // Predicated region
  $region2: #{_lambda_.11} parent=0 // pred_check
    _
  $region3: #{_lambda_.11} parent=0 // pred_check_branch
    %9 = sbr.rel (0) target = $region5
  $region4: #{_lambda_.11} parent=0 // pred_region
    _
  $region5: #{_lambda_.11} parent=0 // pred_fallthru
    _
  // Predicated region
  $region6: #{_lambda_.11} parent=0 // pred_check
    _
  $region7: #{_lambda_.11} parent=0 // pred_check_branch
    %11 = sbr.rel (0) target = $region9
  $region8: #{_lambda_.11} parent=0 // pred_region
    _
  $region9: #{_lambda_.11} parent=0 // pred_fallthru
    _
  // Predicated region
  $region10: #{_lambda_.11} parent=0 // pred_check
    _
  $region11: #{_lambda_.11} parent=0 // pred_check_branch
    %13 = sbr.rel (0) target = $region13
  $region12: #{_lambda_.11} parent=0 // pred_region
    _
  $region13: #{_lambda_.11} parent=0 // pred_fallthru
    _
  %v15 = vld [vmem:[%s0] sm:$0xf]
  %v16 = vld [vmem:[%s0 + $0x4] sm:$0xf]
  %v17 = vld [vmem:[%s1] sm:$0xf]
  %v18 = vld [vmem:[%s1 + $0x4] sm:$0xf]
  %v19 = vld [vmem:[%s1 + $0x8] sm:$0xf]
  %v20 = vld [vmem:[%s1 + $0xc] sm:$0xf]
  %v21 = vld [vmem:[%s2] sm:$0x1]
  %v23 = vperm.slane %v21, 0
  %v27 = vunpack.c.l.b16 %v15
  %v28 = vunpack.c.l.b16 %v16
  %v29 = vpack.c.b16 %v28, %v27
  %v34 = vunpack.c.l.b16 %v17
  %v35 = vunpack.c.l.b16 %v18
  %v36 = vunpack.c.l.b16 %v19
  %v37 = vunpack.c.l.b16 %v20
  %v38 = vpack.c.b16 %v35, %v34
  %v39 = vpack.c.b16 %v37, %v36
  %vm42 = vcmask 261120
  %v44 = vsel %vm42, %v29, 0
  %46 = vmatpush.bf16.msra.mxu0 0
  %47 = vmatpush.bf16.msra.mxu0 0
  %48 = vmatpush.bf16.msra.mxu0 0
  %49 = vmatpush.bf16.msra.mxu0 0
  %50 = vmatpush.bf16.msra.mxu0 0
  %51 = vmatpush.bf16.msra.mxu0 0
  %52 = vmatpush.bf16.msra.mxu0 %v39
  %53 = vmatpush.bf16.msra.mxu0 %v38
  %54 = vmatmul.bf16.gmra.mxu0 %v44
  %v55 = vpop.f32.mrf.mxu0
  %v56 = vadd.f32 %v23, %v55
  %v57 = vpop.f32.mrf.mxu0
  %v58 = vadd.f32 %v23, %v57
  %59 = vdwg.mxu0
  %v60 = vpack.c.bf16 %v56, %v56
  %v61 = vpack.c.bf16 %v58, %v58
  %vm62 = vcmask 781312
  %63 = vst.msk [vmem:[%s3] sm:$0xf] %vm62, %v60
  %64 = vst.msk [vmem:[%s3 + $0x4] sm:$0xf] %vm62, %v61
  // Predicated region
  $region14: #{_lambda_.11} parent=0 // pred_check
    _
  $region15: #{_lambda_.11} parent=0 // pred_check_branch
    %66 = sbr.rel (0) target = $region17
  $region16: #{_lambda_.11} parent=0 // pred_region
    _
  $region17: #{_lambda_.11} parent=0 // pred_fallthru
    _
  // Predicated region
  $region18: #{_lambda_.11} parent=0 // pred_check
    _
  $region19: #{_lambda_.11} parent=0 // pred_check_branch
    %68 = sbr.rel (0) target = $region21
  $region20: #{_lambda_.11} parent=0 // pred_region
    _
  $region21: #{_lambda_.11} parent=0 // pred_fallthru
    _

// kernel: _lambda_.13
$region0: #{_lambda_.13}
  #allocation0 [shape = 'u32[]', space=smem, size = 0x4, offset = 0x4, fixed_abs, tag = 'smem constant byte address 0x4 - core index']
  #allocation1 [shape = 'u32[72,128]{1,0:T(1,128)}', space=vmem, size = 0x9000, scoped, tag = 'internal scratch']
  %s0 = inlined_call_operand.vmem [shape: bf16[16,32], index: 0, kind: input, shape index: {}]
  %s1 = inlined_call_operand.vmem [shape: bf16[32,32], index: 1, kind: input, shape index: {}]
  %s2 = inlined_call_operand.vmem [shape: f32[1,32], index: 2, kind: input, shape index: {}]
  %s3 = inlined_call_operand.vmem [shape: bf16[16,32], index: 3, kind: input, shape index: {}]
  %s4 = inlined_call_operand.vmem [shape: f32[1,32], index: 4, kind: input, shape index: {}]
  %s5 = inlined_call_operand.vmem [shape: f32[1,32], index: 5, kind: input, shape index: {}]
  %s6 = inlined_call_operand.vmem [shape: bf16[16,32], index: 6, kind: output, shape index: {}]
  %s7 = sld [smem:[#allocation0]]
  $region34: #{_lambda_.13} parent=0
    _
  %s9 = ssub.s32 1, %s7
  %s10 = scalar_select 0, %s9, %s7
  // Predicated region
  $region2: #{_lambda_.13} parent=0 // pred_check
    _
  $region3: #{_lambda_.13} parent=0 // pred_check_branch
    %12 = sbr.rel (0) target = $region5
  $region4: #{_lambda_.13} parent=0 // pred_region
    _
  $region5: #{_lambda_.13} parent=0 // pred_fallthru
    _
  // Predicated region
  $region6: #{_lambda_.13} parent=0 // pred_check
    _
  $region7: #{_lambda_.13} parent=0 // pred_check_branch
    %14 = sbr.rel (0) target = $region9
  $region8: #{_lambda_.13} parent=0 // pred_region
    _
  $region9: #{_lambda_.13} parent=0 // pred_fallthru
    _
  // Predicated region
  $region10: #{_lambda_.13} parent=0 // pred_check
    _
  $region11: #{_lambda_.13} parent=0 // pred_check_branch
    %16 = sbr.rel (0) target = $region13
  $region12: #{_lambda_.13} parent=0 // pred_region
    _
  $region13: #{_lambda_.13} parent=0 // pred_fallthru
    _
  // Predicated region
  $region14: #{_lambda_.13} parent=0 // pred_check
    _
  $region15: #{_lambda_.13} parent=0 // pred_check_branch
    %18 = sbr.rel (0) target = $region17
  $region16: #{_lambda_.13} parent=0 // pred_region
    _
  $region17: #{_lambda_.13} parent=0 // pred_fallthru
    _
  // Predicated region
  $region18: #{_lambda_.13} parent=0 // pred_check
    _
  $region19: #{_lambda_.13} parent=0 // pred_check_branch
    %20 = sbr.rel (0) target = $region21
  $region20: #{_lambda_.13} parent=0 // pred_region
    _
  $region21: #{_lambda_.13} parent=0 // pred_fallthru
    _
  // Predicated region
  $region22: #{_lambda_.13} parent=0 // pred_check
    _
  $region23: #{_lambda_.13} parent=0 // pred_check_branch
    %22 = sbr.rel (0) target = $region25
  $region24: #{_lambda_.13} parent=0 // pred_region
    _
  $region25: #{_lambda_.13} parent=0 // pred_fallthru
    _
  %v24 = vld [vmem:[%s0] sm:$0xf]
  %v25 = vld [vmem:[%s0 + $0x4] sm:$0xf]
  %v26 = vld [vmem:[%s1] sm:$0xf]
  %v27 = vld [vmem:[%s1 + $0x4] sm:$0xf]
  %v28 = vld [vmem:[%s1 + $0x8] sm:$0xf]
  %v29 = vld [vmem:[%s1 + $0xc] sm:$0xf]
  %v30 = vld [vmem:[%s2] sm:$0x1]
  %v32 = vperm.slane %v30, 0
  %v36 = vunpack.c.l.b16 %v24
  %v37 = vunpack.c.l.b16 %v25
  %v38 = vpack.c.b16 %v37, %v36
  %v43 = vunpack.c.l.b16 %v26
  %v44 = vunpack.c.l.b16 %v27
  %v45 = vunpack.c.l.b16 %v28
  %v46 = vunpack.c.l.b16 %v29
  %v47 = vpack.c.b16 %v44, %v43
  %v48 = vpack.c.b16 %v46, %v45
  %vm51 = vcmask 261120
  %v53 = vsel %vm51, %v38, 0
  %55 = vmatpush.bf16.msra.mxu0 0
  %56 = vmatpush.bf16.msra.mxu0 0
  %57 = vmatpush.bf16.msra.mxu0 0
  %58 = vmatpush.bf16.msra.mxu0 0
  %59 = vmatpush.bf16.msra.mxu0 0
  %60 = vmatpush.bf16.msra.mxu0 0
  %61 = vmatpush.bf16.msra.mxu0 %v48
  %62 = vmatpush.bf16.msra.mxu0 %v47
  %63 = vmatmul.bf16.gmra.mxu0 %v53
  %v64 = vpop.f32.mrf.mxu0
  %v65 = vadd.f32 %v32, %v64
  %v66 = vpop.f32.mrf.mxu0
  %v67 = vadd.f32 %v32, %v66
  %68 = vdwg.mxu0
  %v69 = vld [vmem:[%s3] sm:$0xf]
  %v70 = vld [vmem:[%s3 + $0x4] sm:$0xf]
  %v71 = vunpack.c.l.bf16 %v69
  %v72 = vunpack.c.l.bf16 %v70
  %v73 = vadd.f32 %v65, %v71
  %v74 = vadd.f32 %v67, %v72
  %v75 = vld [vmem:[%s4] sm:$0x1]
  %v76 = vld [vmem:[%s5] sm:$0x1]
  %v77 = vsel %vm51, %v73, 0.0
  %78 = vadd.xlane.f32.xlu0 %v77
  %v79 = vpop.xlane.xlu0 %78
  %v80 = vsel %vm51, %v74, 0.0
  %81 = vadd.xlane.f32.xlu0 %v80
  %v82 = vpop.xlane.xlu0 %81
  %v83 = vrcp.pop 32.0
  %v84 = vmul.f32 32.0, %v83
  %v85 = vsub.f32 1.0, %v84
  %v86 = vmul.f32 %v83, %v85
  %v87 = vadd.f32 %v83, %v86
  %vm88 = vweird.f32 %v83
  %v89 = vsel %vm88, %v83, %v87
  %v90 = vmul.f32 %v79, %v89
  %v91 = vmul.f32 %v82, %v89
  %v92 = vsub.f32 %v73, %v90
  %v93 = vsub.f32 %v74, %v91
  %v94 = vmul.f32 %v92, %v92
  %v95 = vmul.f32 %v93, %v93
  %v96 = vsel %vm51, %v94, 0.0
  %97 = vadd.xlane.f32.xlu0 %v96
  %v98 = vpop.xlane.xlu0 %97
  %v99 = vsel %vm51, %v95, 0.0
  %100 = vadd.xlane.f32.xlu0 %v99
  %v101 = vpop.xlane.xlu0 %100
  %v102 = vmul.f32 %v98, %v89
  %v103 = vmul.f32 %v101, %v89
  %v104 = vadd.f32 %v102, 1e-05
  %v105 = vadd.f32 %v103, 1e-05
  %v106 = vrsqrt.pop %v104
  %v107 = vmul.f32 %v106, %v104
  %v108 = vmul.f32 %v107, %v106
  %v109 = vmul.f32 0.5, %v108
  %v110 = vsub.f32 1.5, %v109
  %v111 = vmul.f32 %v106, %v110
  %vm112 = vweird.f32 %v104
  %vm113 = vweird.f32 %v106
  %vm114 = vmor %vm112, %vm113
  %v115 = vsel %vm114, %v106, %v111
  %v116 = vrsqrt.pop %v105
  %v117 = vmul.f32 %v116, %v105
  %v118 = vmul.f32 %v117, %v116
  %v119 = vmul.f32 0.5, %v118
  %v120 = vsub.f32 1.5, %v119
  %v121 = vmul.f32 %v116, %v120
  %vm122 = vweird.f32 %v105
  %vm123 = vweird.f32 %v116
  %vm124 = vmor %vm122, %vm123
  %v125 = vsel %vm124, %v116, %v121
  %v126 = vmul.f32 %v92, %v115
  %v127 = vmul.f32 %v93, %v125
  %v129 = vperm.slane %v75, 0
  %v131 = vmul.f32 %v126, %v129
  %v132 = vmul.f32 %v127, %v129
  %v134 = vperm.slane %v76, 0
  %v136 = vadd.f32 %v131, %v134
  %v137 = vadd.f32 %v132, %v134
  %v138 = vpack.c.bf16 %v136, %v136
  %v139 = vpack.c.bf16 %v137, %v137
  %vm140 = vcmask 257024
  %141 = vst.msk [vmem:[%s6] sm:$0xf] %vm140, %v138
  %142 = vst.msk [vmem:[%s6 + $0x4] sm:$0xf] %vm140, %v139
  // Predicated region
  $region26: #{_lambda_.13} parent=0 // pred_check
    _
  $region27: #{_lambda_.13} parent=0 // pred_check_branch
    %144 = sbr.rel (0) target = $region29
  $region28: #{_lambda_.13} parent=0 // pred_region
    _
  $region29: #{_lambda_.13} parent=0 // pred_fallthru
    _
  // Predicated region
  $region30: #{_lambda_.13} parent=0 // pred_check
    _
  $region31: #{_lambda_.13} parent=0 // pred_check_branch
    %146 = sbr.rel (0) target = $region33
  $region32: #{_lambda_.13} parent=0 // pred_region
    _
  $region33: #{_lambda_.13} parent=0 // pred_fallthru
    _

// kernel: _lambda_.12
$region0: #{_lambda_.12}
  #allocation0 [shape = 'u32[]', space=smem, size = 0x4, offset = 0x4, fixed_abs, tag = 'smem constant byte address 0x4 - core index']
  #allocation1 [shape = 'u32[72,128]{1,0:T(1,128)}', space=vmem, size = 0x9000, scoped, tag = 'internal scratch']
  %s0 = inlined_call_operand.vmem [shape: bf16[2,8,96], index: 0, kind: input, shape index: {}]
  %s1 = inlined_call_operand.vmem [shape: f32[2,1,8], index: 1, kind: input, shape index: {}]
  %s2 = inlined_call_operand.vmem [shape: bf16[2,8,32], index: 2, kind: output, shape index: {}]
  %s3 = sld [smem:[#allocation0]]
  $region41: #{_lambda_.12} parent=0
    _
  %s5 = ssub.s32 1, %s3
  %s6 = scalar_select 0, %s5, %s3
  loop: start=0, step=1, limit=4
  $region2: #{_lambda_.12} parent=0 // loop_pre_header
    _
  $region3: #{_lambda_.12} parent=0 // loop_header
    %s8 = sphi 0, %s12
    %p9 = scmp.ge.s32.totalorder %s8, 4
    %s18 = sphi 0, %s20
    %s21 = sphi 0, %s18
    %s22 = sphi 0, %s21
    %s38 = sphi 0, %s22
    %s44 = sphi 0, %s46
    %s47 = sphi 0, %s44
    %s48 = sphi 0, %s47
    %s64 = sphi 0, %s48
    %s70 = sphi 0, %s72
    %s73 = sphi 0, %s70
    %s74 = sphi 0, %s73
    %s90 = sphi 0, %s74
  $region4: #{_lambda_.12} parent=0 // loop_header_branch
    %11 = sbr.rel (%p9) target = $region8
  $region5: #{_lambda_.12} parent=0 // loop_body
    %s13 = ssub.s32 %s8, 1
    %s14 = ssub.s32 %s8, 2
    %s15 = sadd.s32 %s8, 1
    %s16 = ssub.s32 %s8, %s15
    %p17 = scmp.eq.s32.totalorder %s16, 0
    %s19 = sadd.s32 %s18, 1
    %s20 = scalar_select %p17, %s18, %s19
    %p23 = pneg %p17
    %p24 = scmp.eq.s32.totalorder %s8, 1
    %p25 = por %p23, %p24
    %p26 = scmp.ne.s32.totalorder %s18, %s21
    %p27 = scmp.eq.s32.totalorder %s8, 0
    %p28 = por %p26, %p27
    %p29 = scmp.ne.s32.totalorder %s18, %s21
    %p30 = scmp.eq.s32.totalorder %s13, 1
    %p31 = por %p29, %p30
    %p32 = scmp.ne.s32.totalorder %s21, %s22
    %p33 = scmp.eq.s32.totalorder %s13, 0
    %p34 = por %p32, %p33
    %p35 = scmp.ne.s32.totalorder %s21, %s22
    %p36 = scmp.eq.s32.totalorder %s14, 1
    %p37 = por %p35, %p36
    %p39 = scmp.ne.s32.totalorder %s22, %s38
    %p40 = scmp.eq.s32.totalorder %s14, 0
    %p41 = por %p39, %p40
    %s42 = ssub.s32 %s8, %s15
    %p43 = scmp.eq.s32.totalorder %s42, 0
    %s45 = sadd.s32 %s44, 1
    %s46 = scalar_select %p43, %s44, %s45
    %p49 = pneg %p43
    %p50 = scmp.eq.s32.totalorder %s8, 1
    %p51 = por %p49, %p50
    %p52 = scmp.ne.s32.totalorder %s44, %s47
    %p53 = scmp.eq.s32.totalorder %s8, 0
    %p54 = por %p52, %p53
    %p55 = scmp.ne.s32.totalorder %s44, %s47
    %p56 = scmp.eq.s32.totalorder %s13, 1
    %p57 = por %p55, %p56
    %p58 = scmp.ne.s32.totalorder %s47, %s48
    %p59 = scmp.eq.s32.totalorder %s13, 0
    %p60 = por %p58, %p59
    %p61 = scmp.ne.s32.totalorder %s47, %s48
    %p62 = scmp.eq.s32.totalorder %s14, 1
    %p63 = por %p61, %p62
    %p65 = scmp.ne.s32.totalorder %s48, %s64
    %p66 = scmp.eq.s32.totalorder %s14, 0
    %p67 = por %p65, %p66
    %s68 = ssub.s32 %s8, %s15
    %p69 = scmp.eq.s32.totalorder %s68, 0
    %s71 = sadd.s32 %s70, 1
    %s72 = scalar_select %p69, %s70, %s71
    %p75 = pneg %p69
    %p76 = scmp.eq.s32.totalorder %s8, 1
    %p77 = por %p75, %p76
    %p78 = scmp.ne.s32.totalorder %s70, %s73
    %p79 = scmp.eq.s32.totalorder %s8, 0
    %p80 = por %p78, %p79
    %p81 = scmp.ne.s32.totalorder %s70, %s73
    %p82 = scmp.eq.s32.totalorder %s13, 1
    %p83 = por %p81, %p82
    %p84 = scmp.ne.s32.totalorder %s73, %s74
    %p85 = scmp.eq.s32.totalorder %s13, 0
    %p86 = por %p84, %p85
    %p87 = scmp.ne.s32.totalorder %s73, %s74
    %p88 = scmp.eq.s32.totalorder %s14, 1
    %p89 = por %p87, %p88
    %p91 = scmp.ne.s32.totalorder %s74, %s90
    %p92 = scmp.eq.s32.totalorder %s14, 0
    %p93 = por %p91, %p92
    %p94 = scmp.le.s32.totalorder 1, %s8
    %p95 = scmp.lt.s32.totalorder %s8, 3
    %p96 = pnand %p94, %p95
    %p97 = pneg %p96
    // Predicated region
    $region9: #{_lambda_.12} parent=5 // pred_check
      _
    $region10: #{_lambda_.12} parent=5 // pred_check_branch
      %99 = sbr.rel (%p96) target = $region12
    $region11: #{_lambda_.12} parent=5 // pred_region
      %s100 = ssub.s32 %s8, 1
    $region12: #{_lambda_.12} parent=5 // pred_fallthru
      _
    %p101 = scmp.lt.s32.totalorder %s8, 2
    // Predicated region
    $region13: #{_lambda_.12} parent=5 // pred_check
      %p102 = pneg %p101
    $region14: #{_lambda_.12} parent=5 // pred_check_branch
      %104 = sbr.rel (%p102) target = $region16
    $region15: #{_lambda_.12} parent=5 // pred_region
      // Predicated region
      $region17: #{_lambda_.12} parent=15 // pred_check
        %p105 = pneg %p28
      $region18: #{_lambda_.12} parent=15 // pred_check_branch
        %107 = sbr.rel (%p105) target = $region20
      $region19: #{_lambda_.12} parent=15 // pred_region
        %p108 = scmp.lt.s32.totalorder %s8, 1
        %s109 = scalar_select %p108, %s8, 1
        %s110 = smul.addr %s109, 4
        %s111 = scalar_lea.vmem %s0, %s110
      $region20: #{_lambda_.12} parent=15 // pred_fallthru
        _
      // Predicated region
      $region21: #{_lambda_.12} parent=15 // pred_check
        %p112 = pneg %p54
      $region22: #{_lambda_.12} parent=15 // pred_check_branch
        %114 = sbr.rel (%p112) target = $region24
      $region23: #{_lambda_.12} parent=15 // pred_region
        %p115 = scmp.lt.s32.totalorder %s8, 1
        %s116 = scalar_select %p115, %s8, 1
        %s117 = scalar_lea.vmem %s1, %s116
      $region24: #{_lambda_.12} parent=15 // pred_fallthru
        _
    $region16: #{_lambda_.12} parent=5 // pred_fallthru
      _
    %p118 = scmp.le.s32.totalorder 1, %s8
    %p119 = scmp.lt.s32.totalorder %s8, 3
    %p120 = pnand %p118, %p119
    %p121 = pneg %p120
    // Predicated region
    $region25: #{_lambda_.12} parent=5 // pred_check
      _
    $region26: #{_lambda_.12} parent=5 // pred_check_branch
      %123 = sbr.rel (%p120) target = $region28
    $region27: #{_lambda_.12} parent=5 // pred_region
      %s124 = ssub.s32 %s8, 1
      %p125 = scmp.lt.s32.totalorder %s13, 1
      %s126 = scalar_select %p125, %s13, 1
      %s127 = smul.addr %s126, 4
      %s128 = scalar_lea.vmem %s0, %s127
      %p129 = pneg %p34
      %p130 = pneg %p31
      %p131 = scmp.lt.s32.totalorder %s13, 1
      %s132 = scalar_select %p131, %s13, 1
      %s133 = scalar_lea.vmem %s1, %s132
      %p134 = pneg %p60
      %p135 = pneg %p57
      %p136 = pneg %p86
      %p137 = pneg %p83
      %p138 = scmp.lt.s32.totalorder %s13, 1
      %s139 = scalar_select %p138, %s13, 1
      %s140 = smul.addr %s139, 4
      %s141 = scalar_lea.vmem %s2, %s140
      %p142 = scmp.lt.s32.totalorder %s13, 1
      %s143 = scalar_select %p142, %s13, 1
      %s144 = smul.addr %s143, 4
      %s145 = scalar_lea.vmem %s0, %s144
      %p146 = scmp.lt.s32.totalorder %s13, 1
      %s147 = scalar_select %p146, %s13, 1
      %s148 = scalar_lea.vmem %s1, %s147
      %p149 = scmp.lt.s32.totalorder %s13, 1
      %s150 = scalar_select %p149, %s13, 1
      %s151 = smul.addr %s150, 4
      %s152 = scalar_lea.vmem %s2, %s151
      %v154 = vld [vmem:[%s145] sm:$0xf]
      %v155 = vld [vmem:[%s148] sm:$0x1]
      %v156 = vsub.f32 %v155, 1.0
      %v157 = vmul.f32 %v156, 1e+09
      %v159 = vperm.slane %v157, 0
      %v162 = vunpack.c.l.b16 %v154
      %v163 = vpack.c.b16 %v162, %v162
      %164 = vrot.lane.b32.xlu0 %v163, 96
      %v165 = vpop.permute.xlu0 %164
      %vm166 = vcmask 64512
      %v168 = vsel %vm166, %v154, 0
      %v171 = vsel %vm166, %v165, 0
      %173 = vmatpush.bf16.xpose.msra.mxu0 0
      %174 = vmatpush.bf16.xpose.msra.mxu0 0
      %175 = vmatpush.bf16.xpose.msra.mxu0 0
      %176 = vmatpush.bf16.xpose.msra.mxu0 0
      %177 = vmatpush.bf16.xpose.msra.mxu0 0
      %178 = vmatpush.bf16.xpose.msra.mxu0 0
      %179 = vmatpush.bf16.xpose.msra.mxu0 0
      %180 = vmatpush.bf16.xpose.msra.mxu0 %v171
      %181 = vmatmul.bf16.gmra.mxu0 %v168
      %v182 = vpop.f32.mrf.mxu0
      %v183 = vadd.f32 %v159, %v182
      %v184 = vpop.f32.mrf.mxu0
      %185 = vdwg.mxu0
      %v186 = vsel %vm166, %v183, -inf
      %187 = vmax.xlane.f32.xlu0 %v186
      %v188 = vpop.xlane.xlu0 %187
      %v189 = vsub.f32 %v183, %v188
      %v190 = vmul.f32 %v189, 1.442695
      %v191 = vpow.pop %v190
      %v192 = vsel %vm166, %v191, 0.0
      %193 = vadd.xlane.f32.xlu0 %v192
      %v194 = vpop.xlane.xlu0 %193
      %v195 = vrcp.pop %v194
      %v196 = vmul.f32 %v191, %v195
      %v197 = vpack.c.bf16 %v196, %v196
      %198 = vrot.lane.b32.xlu0 %v163, 64
      %v199 = vpop.permute.xlu0 %198
      %v201 = vsel %vm166, %v197, 0
      %vm203 = vcmask 1043456
      %v205 = vsel %vm203, %v199, 0
      %207 = vmatpush.bf16.msra.mxu0 0
      %208 = vmatpush.bf16.msra.mxu0 0
      %209 = vmatpush.bf16.msra.mxu0 0
      %210 = vmatpush.bf16.msra.mxu0 0
      %211 = vmatpush.bf16.msra.mxu0 0
      %212 = vmatpush.bf16.msra.mxu0 0
      %213 = vmatpush.bf16.msra.mxu0 0
      %214 = vmatpush.bf16.msra.mxu0 %v205
      %215 = vmatmul.bf16.gmra.mxu0 %v201
      %v216 = vpop.f32.mrf.mxu0
      %v217 = vadd.f32 0.0, %v216
      %v218 = vpop.f32.mrf.mxu0
      %219 = vdwg.mxu0
      %220 = vrot.lane.b32.xlu0 %v163, 120
      %v221 = vpop.permute.xlu0 %220
      %222 = vrot.lane.b32.xlu0 %v163, 88
      %v223 = vpop.permute.xlu0 %222
      %v225 = vsel %vm166, %v221, 0
      %v228 = vsel %vm166, %v223, 0
      %230 = vmatpush.bf16.xpose.msra.mxu0 0
      %231 = vmatpush.bf16.xpose.msra.mxu0 0
      %232 = vmatpush.bf16.xpose.msra.mxu0 0
      %233 = vmatpush.bf16.xpose.msra.mxu0 0
      %234 = vmatpush.bf16.xpose.msra.mxu0 0
      %235 = vmatpush.bf16.xpose.msra.mxu0 0
      %236 = vmatpush.bf16.xpose.msra.mxu0 0
      %237 = vmatpush.bf16.xpose.msra.mxu0 %v228
      %238 = vmatmul.bf16.gmra.mxu0 %v225
      %v239 = vpop.f32.mrf.mxu0
      %v240 = vadd.f32 %v159, %v239
      %v241 = vpop.f32.mrf.mxu0
      %242 = vdwg.mxu0
      %v243 = vsel %vm166, %v240, -inf
      %244 = vmax.xlane.f32.xlu0 %v243
      %v245 = vpop.xlane.xlu0 %244
      %v246 = vsub.f32 %v240, %v245
      %v247 = vmul.f32 %v246, 1.442695
      %v248 = vpow.pop %v247
      %v249 = vsel %vm166, %v248, 0.0
      %250 = vadd.xlane.f32.xlu0 %v249
      %v251 = vpop.xlane.xlu0 %250
      %v252 = vrcp.pop %v251
      %v253 = vmul.f32 %v248, %v252
      %v254 = vpack.c.bf16 %v253, %v253
      %255 = vrot.lane.b32.xlu0 %v163, 56
      %v256 = vpop.permute.xlu0 %255
      %v258 = vsel %vm166, %v254, 0
      %v261 = vsel %vm203, %v256, 0
      %263 = vmatpush.bf16.msra.mxu0 0
      %264 = vmatpush.bf16.msra.mxu0 0
      %265 = vmatpush.bf16.msra.mxu0 0
      %266 = vmatpush.bf16.msra.mxu0 0
      %267 = vmatpush.bf16.msra.mxu0 0
      %268 = vmatpush.bf16.msra.mxu0 0
      %269 = vmatpush.bf16.msra.mxu0 0
      %270 = vmatpush.bf16.msra.mxu0 %v261
      %271 = vmatmul.bf16.gmra.mxu0 %v258
      %v272 = vpop.f32.mrf.mxu0
      %v273 = vadd.f32 0.0, %v272
      %v274 = vpop.f32.mrf.mxu0
      %275 = vdwg.mxu0
      %276 = vrot.lane.b32.xlu0 %v163, 112
      %v277 = vpop.permute.xlu0 %276
      %278 = vrot.lane.b32.xlu0 %v163, 80
      %v279 = vpop.permute.xlu0 %278
      %v281 = vsel %vm166, %v277, 0
      %v284 = vsel %vm166, %v279, 0
      %286 = vmatpush.bf16.xpose.msra.mxu0 0
      %287 = vmatpush.bf16.xpose.msra.mxu0 0
      %288 = vmatpush.bf16.xpose.msra.mxu0 0
      %289 = vmatpush.bf16.xpose.msra.mxu0 0
      %290 = vmatpush.bf16.xpose.msra.mxu0 0
      %291 = vmatpush.bf16.xpose.msra.mxu0 0
      %292 = vmatpush.bf16.xpose.msra.mxu0 0
      %293 = vmatpush.bf16.xpose.msra.mxu0 %v284
      %294 = vmatmul.bf16.gmra.mxu0 %v281
      %v295 = vpop.f32.mrf.mxu0
      %v296 = vadd.f32 %v159, %v295
      %v297 = vpop.f32.mrf.mxu0
      %298 = vdwg.mxu0
      %v299 = vsel %vm166, %v296, -inf
      %300 = vmax.xlane.f32.xlu0 %v299
      %v301 = vpop.xlane.xlu0 %300
      %v302 = vsub.f32 %v296, %v301
      %v303 = vmul.f32 %v302, 1.442695
      %v304 = vpow.pop %v303
      %v305 = vsel %vm166, %v304, 0.0
      %306 = vadd.xlane.f32.xlu0 %v305
      %v307 = vpop.xlane.xlu0 %306
      %v308 = vrcp.pop %v307
      %v309 = vmul.f32 %v304, %v308
      %v310 = vpack.c.bf16 %v309, %v309
      %311 = vrot.lane.b32.xlu0 %v163, 48
      %v312 = vpop.permute.xlu0 %311
      %v314 = vsel %vm166, %v310, 0
      %v317 = vsel %vm203, %v312, 0
      %319 = vmatpush.bf16.msra.mxu0 0
      %320 = vmatpush.bf16.msra.mxu0 0
      %321 = vmatpush.bf16.msra.mxu0 0
      %322 = vmatpush.bf16.msra.mxu0 0
      %323 = vmatpush.bf16.msra.mxu0 0
      %324 = vmatpush.bf16.msra.mxu0 0
      %325 = vmatpush.bf16.msra.mxu0 0
      %326 = vmatpush.bf16.msra.mxu0 %v317
      %327 = vmatmul.bf16.gmra.mxu0 %v314
      %v328 = vpop.f32.mrf.mxu0
      %v329 = vadd.f32 0.0, %v328
      %v330 = vpop.f32.mrf.mxu0
      %331 = vdwg.mxu0
      %332 = vrot.lane.b32.xlu0 %v163, 104
      %v333 = vpop.permute.xlu0 %332
      %334 = vrot.lane.b32.xlu0 %v163, 72
      %v335 = vpop.permute.xlu0 %334
      %v337 = vsel %vm166, %v333, 0
      %v340 = vsel %vm166, %v335, 0
      %342 = vmatpush.bf16.xpose.msra.mxu0 0
      %343 = vmatpush.bf16.xpose.msra.mxu0 0
      %344 = vmatpush.bf16.xpose.msra.mxu0 0
      %345 = vmatpush.bf16.xpose.msra.mxu0 0
      %346 = vmatpush.bf16.xpose.msra.mxu0 0
      %347 = vmatpush.bf16.xpose.msra.mxu0 0
      %348 = vmatpush.bf16.xpose.msra.mxu0 0
      %349 = vmatpush.bf16.xpose.msra.mxu0 %v340
      %350 = vmatmul.bf16.gmra.mxu0 %v337
      %v351 = vpop.f32.mrf.mxu0
      %v352 = vadd.f32 %v159, %v351
      %v353 = vpop.f32.mrf.mxu0
      %354 = vdwg.mxu0
      %v355 = vsel %vm166, %v352, -inf
      %356 = vmax.xlane.f32.xlu0 %v355
      %v357 = vpop.xlane.xlu0 %356
      %v358 = vsub.f32 %v352, %v357
      %v359 = vmul.f32 %v358, 1.442695
      %v360 = vpow.pop %v359
      %v361 = vsel %vm166, %v360, 0.0
      %362 = vadd.xlane.f32.xlu0 %v361
      %v363 = vpop.xlane.xlu0 %362
      %v364 = vrcp.pop %v363
      %v365 = vmul.f32 %v360, %v364
      %v366 = vpack.c.bf16 %v365, %v365
      %367 = vrot.lane.b32.xlu0 %v163, 40
      %v368 = vpop.permute.xlu0 %367
      %v370 = vsel %vm166, %v366, 0
      %v373 = vsel %vm203, %v368, 0
      %375 = vmatpush.bf16.msra.mxu0 0
      %376 = vmatpush.bf16.msra.mxu0 0
      %377 = vmatpush.bf16.msra.mxu0 0
      %378 = vmatpush.bf16.msra.mxu0 0
      %379 = vmatpush.bf16.msra.mxu0 0
      %380 = vmatpush.bf16.msra.mxu0 0
      %381 = vmatpush.bf16.msra.mxu0 0
      %382 = vmatpush.bf16.msra.mxu0 %v373
      %383 = vmatmul.bf16.gmra.mxu0 %v370
      %v384 = vpop.f32.mrf.mxu0
      %v385 = vadd.f32 0.0, %v384
      %v386 = vpop.f32.mrf.mxu0
      %387 = vdwg.mxu0
      %389 = vrot.lane.b32.xlu0 %v273, 8
      %v390 = vpop.permute.xlu0 %389
      %393 = vrot.lane.b32.xlu0 %v329, 16
      %v394 = vpop.permute.xlu0 %393
      %397 = vrot.lane.b32.xlu0 %v385, 24
      %v398 = vpop.permute.xlu0 %397
      %v400 = vsel %vm166, %v217, %v390
      %vm401 = vcmask 130048
      %v402 = vsel %vm401, %v400, %v394
      %vm403 = vcmask 195584
      %v404 = vsel %vm403, %v402, %v398
      %v405 = vpack.c.bf16 %v404, %v404
      %vm406 = vcmask 257024
      %407 = vst.msk [vmem:[%s152] sm:$0xf] %vm406, %v405
      %p408 = scmp.lt.s32.totalorder %s13, 1
      %s409 = scalar_select %p408, %s13, 1
      %s410 = smul.addr %s409, 4
      %s411 = scalar_lea.vmem %s2, %s410
      // Predicated region
      $region29: #{_lambda_.12} parent=27 // pred_check
        %p412 = pneg %p83
      $region30: #{_lambda_.12} parent=27 // pred_check_branch
        %414 = sbr.rel (%p412) target = $region32
      $region31: #{_lambda_.12} parent=27 // pred_region
        _
      $region32: #{_lambda_.12} parent=27 // pred_fallthru
        _
    $region28: #{_lambda_.12} parent=5 // pred_fallthru
      _
    %p415 = scmp.le.s32.totalorder 2, %s8
    // Predicated region
    $region33: #{_lambda_.12} parent=5 // pred_check
      %p416 = pneg %p415
    $region34: #{_lambda_.12} parent=5 // pred_check_branch
      %418 = sbr.rel (%p416) target = $region36
    $region35: #{_lambda_.12} parent=5 // pred_region
      %s419 = ssub.s32 %s8, 2
      // Predicated region
      $region37: #{_lambda_.12} parent=35 // pred_check
        %p420 = pneg %p89
      $region38: #{_lambda_.12} parent=35 // pred_check_branch
        %422 = sbr.rel (%p420) target = $region40
      $region39: #{_lambda_.12} parent=35 // pred_region
        %p423 = scmp.lt.s32.totalorder %s14, 1
        %s424 = scalar_select %p423, %s14, 1
        %s425 = smul.addr %s424, 4
        %s426 = scalar_lea.vmem %s2, %s425
      $region40: #{_lambda_.12} parent=35 // pred_fallthru
        _
    $region36: #{_lambda_.12} parent=5 // pred_fallthru
      _
  $region6: #{_lambda_.12} parent=0 // loop_footer
    %s12 = sadd.s32 1, %s8
  $region7: #{_lambda_.12} parent=0 // loop_footer_branch
    %7 = sbr.rel target = $region3
  $region8: #{_lambda_.12} parent=0 // loop_exit
    _

// kernel: _lambda_.14
$region0: #{_lambda_.14}
  #allocation0 [shape = 'u32[]', space=smem, size = 0x4, offset = 0x4, fixed_abs, tag = 'smem constant byte address 0x4 - core index']
  #allocation1 [shape = 'u32[72,128]{1,0:T(1,128)}', space=vmem, size = 0x9000, scoped, tag = 'internal scratch']
  #allocation2 [shape = 'bf16[16,64]{1,0:T(8,128)(2,1)}', space=vmem, size = 0x1000, scoped, tag = 'scratch operand']
  %s0 = inlined_call_operand.vmem [shape: bf16[16,32], index: 0, kind: input, shape index: {}]
  %s1 = inlined_call_operand.vmem [shape: bf16[32,64], index: 1, kind: input, shape index: {}]
  %s2 = inlined_call_operand.vmem [shape: f32[1,64], index: 2, kind: input, shape index: {}]
  %s3 = inlined_call_operand.vmem [shape: bf16[64,32], index: 3, kind: input, shape index: {}]
  %s4 = inlined_call_operand.vmem [shape: f32[1,32], index: 4, kind: input, shape index: {}]
  %s5 = inlined_call_operand.vmem [shape: f32[1,32], index: 5, kind: input, shape index: {}]
  %s6 = inlined_call_operand.vmem [shape: f32[1,32], index: 6, kind: input, shape index: {}]
  %s7 = inlined_call_operand.vmem [shape: bf16[16,32], index: 7, kind: output, shape index: {}]
  %s8 = sld [smem:[#allocation0]]
  $region38: #{_lambda_.14} parent=0
    _
  %s10 = ssub.s32 1, %s8
  %s11 = scalar_select 0, %s10, %s8
  // Predicated region
  $region2: #{_lambda_.14} parent=0 // pred_check
    _
  $region3: #{_lambda_.14} parent=0 // pred_check_branch
    %13 = sbr.rel (0) target = $region5
  $region4: #{_lambda_.14} parent=0 // pred_region
    _
  $region5: #{_lambda_.14} parent=0 // pred_fallthru
    _
  // Predicated region
  $region6: #{_lambda_.14} parent=0 // pred_check
    _
  $region7: #{_lambda_.14} parent=0 // pred_check_branch
    %15 = sbr.rel (0) target = $region9
  $region8: #{_lambda_.14} parent=0 // pred_region
    _
  $region9: #{_lambda_.14} parent=0 // pred_fallthru
    _
  // Predicated region
  $region10: #{_lambda_.14} parent=0 // pred_check
    _
  $region11: #{_lambda_.14} parent=0 // pred_check_branch
    %17 = sbr.rel (0) target = $region13
  $region12: #{_lambda_.14} parent=0 // pred_region
    _
  $region13: #{_lambda_.14} parent=0 // pred_fallthru
    _
  // Predicated region
  $region14: #{_lambda_.14} parent=0 // pred_check
    _
  $region15: #{_lambda_.14} parent=0 // pred_check_branch
    %19 = sbr.rel (0) target = $region17
  $region16: #{_lambda_.14} parent=0 // pred_region
    _
  $region17: #{_lambda_.14} parent=0 // pred_fallthru
    _
  // Predicated region
  $region18: #{_lambda_.14} parent=0 // pred_check
    _
  $region19: #{_lambda_.14} parent=0 // pred_check_branch
    %21 = sbr.rel (0) target = $region21
  $region20: #{_lambda_.14} parent=0 // pred_region
    _
  $region21: #{_lambda_.14} parent=0 // pred_fallthru
    _
  // Predicated region
  $region22: #{_lambda_.14} parent=0 // pred_check
    _
  $region23: #{_lambda_.14} parent=0 // pred_check_branch
    %23 = sbr.rel (0) target = $region25
  $region24: #{_lambda_.14} parent=0 // pred_region
    _
  $region25: #{_lambda_.14} parent=0 // pred_fallthru
    _
  // Predicated region
  $region26: #{_lambda_.14} parent=0 // pred_check
    _
  $region27: #{_lambda_.14} parent=0 // pred_check_branch
    %25 = sbr.rel (0) target = $region29
  $region28: #{_lambda_.14} parent=0 // pred_region
    _
  $region29: #{_lambda_.14} parent=0 // pred_fallthru
    _
  %v27 = vld [vmem:[%s0] sm:$0xf]
  %v28 = vld [vmem:[%s0 + $0x4] sm:$0xf]
  %v29 = vld [vmem:[%s1] sm:$0xf]
  %v30 = vld [vmem:[%s1 + $0x4] sm:$0xf]
  %v31 = vld [vmem:[%s1 + $0x8] sm:$0xf]
  %v32 = vld [vmem:[%s1 + $0xc] sm:$0xf]
  %v33 = vld [vmem:[%s2] sm:$0x1]
  %v35 = vperm.slane %v33, 0
  %v39 = vunpack.c.l.b16 %v27
  %v40 = vunpack.c.l.b16 %v28
  %v41 = vpack.c.b16 %v40, %v39
  %v46 = vunpack.c.l.b16 %v29
  %v47 = vunpack.c.l.b16 %v30
  %v48 = vunpack.c.l.b16 %v31
  %v49 = vunpack.c.l.b16 %v32
  %v50 = vpack.c.b16 %v47, %v46
  %v51 = vpack.c.b16 %v49, %v48
  %vm54 = vcmask 261120
  %v56 = vsel %vm54, %v41, 0
  %58 = vmatpush.bf16.msra.mxu0 0
  %59 = vmatpush.bf16.msra.mxu0 0
  %60 = vmatpush.bf16.msra.mxu0 0
  %61 = vmatpush.bf16.msra.mxu0 0
  %62 = vmatpush.bf16.msra.mxu0 0
  %63 = vmatpush.bf16.msra.mxu0 0
  %64 = vmatpush.bf16.msra.mxu0 %v51
  %65 = vmatpush.bf16.msra.mxu0 %v50
  %66 = vmatmul.bf16.gmra.mxu0 %v56
  %v67 = vpop.f32.mrf.mxu0
  %v68 = vadd.f32 %v35, %v67
  %v69 = vpop.f32.mrf.mxu0
  %v70 = vadd.f32 %v35, %v69
  %71 = vdwg.mxu0
  %v72 = vmul.f32 %v68, 0.5
  %v73 = vmul.f32 %v70, 0.5
  %v74 = vmul.f32 %v68, 0.044715
  %v75 = vmul.f32 %v70, 0.044715
  %v76 = vmul.f32 %v74, %v68
  %v77 = vmul.f32 %v75, %v70
  %v78 = vmul.f32 %v76, %v68
  %v79 = vmul.f32 %v77, %v70
  %v80 = vadd.f32 %v68, %v78
  %v81 = vadd.f32 %v70, %v79
  %v82 = vmul.f32 %v80, 0.7978846
  %v83 = vmul.f32 %v81, 0.7978846
  %v84 = vtanh.pop %v82
  %v85 = vtanh.pop %v83
  %v86 = vadd.f32 %v84, 1.0
  %v87 = vadd.f32 %v85, 1.0
  %v88 = vmul.f32 %v72, %v86
  %v89 = vmul.f32 %v73, %v87
  %v90 = vpack.c.bf16 %v88, %v88
  %v91 = vpack.c.bf16 %v89, %v89
  %vm92 = vcmask 519168
  %93 = vst.msk [vmem:[#allocation2] sm:$0xf] %vm92, %v90
  %94 = vst.msk [vmem:[#allocation2 + $0x4] sm:$0xf] %vm92, %v91
  %v95 = vld [vmem:[#allocation2] sm:$0xf]
  %v96 = vld [vmem:[#allocation2 + $0x4] sm:$0xf]
  %v97 = vld [vmem:[%s3] sm:$0xf]
  %v98 = vld [vmem:[%s3 + $0x4] sm:$0xf]
  %v99 = vld [vmem:[%s3 + $0x8] sm:$0xf]
  %v100 = vld [vmem:[%s3 + $0xc] sm:$0xf]
  %v101 = vld [vmem:[%s3 + $0x10] sm:$0xf]
  %v102 = vld [vmem:[%s3 + $0x14] sm:$0xf]
  %v103 = vld [vmem:[%s3 + $0x18] sm:$0xf]
  %v104 = vld [vmem:[%s3 + $0x1c] sm:$0xf]
  %v105 = vld [vmem:[%s4] sm:$0x1]
  %v107 = vperm.slane %v105, 0
  %v111 = vunpack.c.l.b16 %v95
  %v112 = vunpack.c.l.b16 %v96
  %v113 = vpack.c.b16 %v112, %v111
  %v122 = vunpack.c.l.b16 %v97
  %v123 = vunpack.c.l.b16 %v98
  %v124 = vunpack.c.l.b16 %v99
  %v125 = vunpack.c.l.b16 %v100
  %v126 = vunpack.c.l.b16 %v101
  %v127 = vunpack.c.l.b16 %v102
  %v128 = vunpack.c.l.b16 %v103
  %v129 = vunpack.c.l.b16 %v104
  %v130 = vpack.c.b16 %v123, %v122
  %v131 = vpack.c.b16 %v125, %v124
  %v132 = vpack.c.b16 %v127, %v126
  %v133 = vpack.c.b16 %v129, %v128
  %vm138 = vcmask 523264
  %v140 = vsel %vm138, %v113, 0
  %142 = vmatpush.bf16.msra.mxu0 0
  %143 = vmatpush.bf16.msra.mxu0 0
  %144 = vmatpush.bf16.msra.mxu0 0
  %145 = vmatpush.bf16.msra.mxu0 0
  %146 = vmatpush.bf16.msra.mxu0 %v133
  %147 = vmatpush.bf16.msra.mxu0 %v132
  %148 = vmatpush.bf16.msra.mxu0 %v131
  %149 = vmatpush.bf16.msra.mxu0 %v130
  %150 = vmatmul.bf16.gmra.mxu0 %v140
  %v151 = vpop.f32.mrf.mxu0
  %v152 = vadd.f32 %v107, %v151
  %v153 = vpop.f32.mrf.mxu0
  %v154 = vadd.f32 %v107, %v153
  %155 = vdwg.mxu0
  %v156 = vld [vmem:[%s0] sm:$0xf]
  %v157 = vld [vmem:[%s0 + $0x4] sm:$0xf]
  %v158 = vunpack.c.l.bf16 %v156
  %v159 = vunpack.c.l.bf16 %v157
  %v160 = vadd.f32 %v152, %v158
  %v161 = vadd.f32 %v154, %v159
  %v162 = vld [vmem:[%s5] sm:$0x1]
  %v163 = vld [vmem:[%s6] sm:$0x1]
  %v164 = vsel %vm54, %v160, 0.0
  %165 = vadd.xlane.f32.xlu0 %v164
  %v166 = vpop.xlane.xlu0 %165
  %v167 = vsel %vm54, %v161, 0.0
  %168 = vadd.xlane.f32.xlu0 %v167
  %v169 = vpop.xlane.xlu0 %168
  %v170 = vrcp.pop 32.0
  %v171 = vmul.f32 32.0, %v170
  %v172 = vsub.f32 1.0, %v171
  %v173 = vmul.f32 %v170, %v172
  %v174 = vadd.f32 %v170, %v173
  %vm175 = vweird.f32 %v170
  %v176 = vsel %vm175, %v170, %v174
  %v177 = vmul.f32 %v166, %v176
  %v178 = vmul.f32 %v169, %v176
  %v179 = vsub.f32 %v160, %v177
  %v180 = vsub.f32 %v161, %v178
  %v181 = vmul.f32 %v179, %v179
  %v182 = vmul.f32 %v180, %v180
  %v183 = vsel %vm54, %v181, 0.0
  %184 = vadd.xlane.f32.xlu0 %v183
  %v185 = vpop.xlane.xlu0 %184
  %v186 = vsel %vm54, %v182, 0.0
  %187 = vadd.xlane.f32.xlu0 %v186
  %v188 = vpop.xlane.xlu0 %187
  %v189 = vmul.f32 %v185, %v176
  %v190 = vmul.f32 %v188, %v176
  %v191 = vadd.f32 %v189, 1e-05
  %v192 = vadd.f32 %v190, 1e-05
  %v193 = vrsqrt.pop %v191
  %v194 = vmul.f32 %v193, %v191
  %v195 = vmul.f32 %v194, %v193
  %v196 = vmul.f32 0.5, %v195
  %v197 = vsub.f32 1.5, %v196
  %v198 = vmul.f32 %v193, %v197
  %vm199 = vweird.f32 %v191
  %vm200 = vweird.f32 %v193
  %vm201 = vmor %vm199, %vm200
  %v202 = vsel %vm201, %v193, %v198
  %v203 = vrsqrt.pop %v192
  %v204 = vmul.f32 %v203, %v192
  %v205 = vmul.f32 %v204, %v203
  %v206 = vmul.f32 0.5, %v205
  %v207 = vsub.f32 1.5, %v206
  %v208 = vmul.f32 %v203, %v207
  %vm209 = vweird.f32 %v192
  %vm210 = vweird.f32 %v203
  %vm211 = vmor %vm209, %vm210
  %v212 = vsel %vm211, %v203, %v208
  %v213 = vmul.f32 %v179, %v202
  %v214 = vmul.f32 %v180, %v212
  %v216 = vperm.slane %v162, 0
  %v218 = vmul.f32 %v213, %v216
  %v219 = vmul.f32 %v214, %v216
  %v221 = vperm.slane %v163, 0
  %v223 = vadd.f32 %v218, %v221
  %v224 = vadd.f32 %v219, %v221
  %v225 = vpack.c.bf16 %v223, %v223
  %v226 = vpack.c.bf16 %v224, %v224
  %vm227 = vcmask 257024
  %228 = vst.msk [vmem:[%s7] sm:$0xf] %vm227, %v225
  %229 = vst.msk [vmem:[%s7 + $0x4] sm:$0xf] %vm227, %v226
  // Predicated region
  $region30: #{_lambda_.14} parent=0 // pred_check
    _
  $region31: #{_lambda_.14} parent=0 // pred_check_branch
    %231 = sbr.rel (0) target = $region33
  $region32: #{_lambda_.14} parent=0 // pred_region
    _
  $region33: #{_lambda_.14} parent=0 // pred_fallthru
    _
  // Predicated region
  $region34: #{_lambda_.14} parent=0 // pred_check
    _
  $region35: #{_lambda_.14} parent=0 // pred_check_branch
    %233 = sbr.rel (0) target = $region37
  $region36: #{_lambda_.14} parent=0 // pred_region
    _
  $region37: #{_lambda_.14} parent=0 // pred_fallthru
    _

// kernel: _lambda_.19
$region0: #{_lambda_.19}
  #allocation0 [shape = 'u32[]', space=smem, size = 0x4, offset = 0x4, fixed_abs, tag = 'smem constant byte address 0x4 - core index']
  #allocation1 [shape = 'u32[72,128]{1,0:T(1,128)}', space=vmem, size = 0x9000, scoped, tag = 'internal scratch']
  %s0 = inlined_call_operand.vmem [shape: bf16[2,32], index: 0, kind: input, shape index: {}]
  %s1 = inlined_call_operand.vmem [shape: bf16[32,32], index: 1, kind: input, shape index: {}]
  %s2 = inlined_call_operand.vmem [shape: f32[1,32], index: 2, kind: input, shape index: {}]
  %s3 = inlined_call_operand.vmem [shape: bf16[32,32], index: 3, kind: input, shape index: {}]
  %s4 = inlined_call_operand.vmem [shape: f32[1,32], index: 4, kind: input, shape index: {}]
  %s5 = inlined_call_operand.vmem [shape: bf16[32,16], index: 5, kind: input, shape index: {}]
  %s6 = inlined_call_operand.vmem [shape: f32[1,16], index: 6, kind: input, shape index: {}]
  %s7 = inlined_call_operand.hbm [shape: f32[2,32], index: 7, kind: output, shape index: {0}]
  %s8 = inlined_call_operand.hbm [shape: f32[2,16], index: 8, kind: output, shape index: {1}]
  %9 = xla_tuple %s7, %s8
  %s10 = sld [smem:[#allocation0]]
  $region46: #{_lambda_.19} parent=0
    _
  %s12 = ssub.s32 1, %s10
  %s13 = scalar_select 0, %s12, %s10
  $region1: #{_lambda_.19} parent=0
    #allocation2 [shape = 'u8[1024]{0}', space=vmem, size = 0x400, scoped, tag = 'output window, operand 0, single buffered']
    #allocation3 [shape = 's32[1]{0}', space=sflag, size = 0x4, scoped, tag = 'scoped memory for _lambda_.19']
    #allocation4 [shape = 'u8[1024]{0}', space=vmem, size = 0x400, scoped, tag = 'output window, operand 1, single buffered']
    #allocation5 [shape = 's32[1]{0}', space=sflag, size = 0x4, scoped, tag = 'scoped memory for _lambda_.19']
    %14 = vsyncpa [#allocation3], 0
    %15 = vsyncpa [#allocation5], 0
    // Predicated region
    $region2: #{_lambda_.19} parent=1 // pred_check
      _
    $region3: #{_lambda_.19} parent=1 // pred_check_branch
      %17 = sbr.rel (0) target = $region5
    $region4: #{_lambda_.19} parent=1 // pred_region
      _
    $region5: #{_lambda_.19} parent=1 // pred_fallthru
      _
    // Predicated region
    $region6: #{_lambda_.19} parent=1 // pred_check
      _
    $region7: #{_lambda_.19} parent=1 // pred_check_branch
      %19 = sbr.rel (0) target = $region9
    $region8: #{_lambda_.19} parent=1 // pred_region
      _
    $region9: #{_lambda_.19} parent=1 // pred_fallthru
      _
    // Predicated region
    $region10: #{_lambda_.19} parent=1 // pred_check
      _
    $region11: #{_lambda_.19} parent=1 // pred_check_branch
      %21 = sbr.rel (0) target = $region13
    $region12: #{_lambda_.19} parent=1 // pred_region
      _
    $region13: #{_lambda_.19} parent=1 // pred_fallthru
      _
    // Predicated region
    $region14: #{_lambda_.19} parent=1 // pred_check
      _
    $region15: #{_lambda_.19} parent=1 // pred_check_branch
      %23 = sbr.rel (0) target = $region17
    $region16: #{_lambda_.19} parent=1 // pred_region
      _
    $region17: #{_lambda_.19} parent=1 // pred_fallthru
      _
    // Predicated region
    $region18: #{_lambda_.19} parent=1 // pred_check
      _
    $region19: #{_lambda_.19} parent=1 // pred_check_branch
      %25 = sbr.rel (0) target = $region21
    $region20: #{_lambda_.19} parent=1 // pred_region
      _
    $region21: #{_lambda_.19} parent=1 // pred_fallthru
      _
    // Predicated region
    $region22: #{_lambda_.19} parent=1 // pred_check
      _
    $region23: #{_lambda_.19} parent=1 // pred_check_branch
      %27 = sbr.rel (0) target = $region25
    $region24: #{_lambda_.19} parent=1 // pred_region
      _
    $region25: #{_lambda_.19} parent=1 // pred_fallthru
      _
    // Predicated region
    $region26: #{_lambda_.19} parent=1 // pred_check
      _
    $region27: #{_lambda_.19} parent=1 // pred_check_branch
      %29 = sbr.rel (0) target = $region29
    $region28: #{_lambda_.19} parent=1 // pred_region
      _
    $region29: #{_lambda_.19} parent=1 // pred_fallthru
      _
    %v31 = vld [vmem:[%s0] sm:$0x1]
    %v32 = vld [vmem:[%s1] sm:$0xf]
    %v33 = vld [vmem:[%s1 + $0x4] sm:$0xf]
    %v34 = vld [vmem:[%s1 + $0x8] sm:$0xf]
    %v35 = vld [vmem:[%s1 + $0xc] sm:$0xf]
    %v36 = vld [vmem:[%s2] sm:$0x1]
    %v38 = vperm.slane %v36, 0
    %v44 = vunpack.c.l.b16 %v32
    %v45 = vunpack.c.l.b16 %v33
    %v46 = vunpack.c.l.b16 %v34
    %v47 = vunpack.c.l.b16 %v35
    %v48 = vpack.c.b16 %v45, %v44
    %v49 = vpack.c.b16 %v47, %v46
    %vm52 = vcmask 261120
    %v54 = vsel %vm52, %v31, 0
    %56 = vmatpush.bf16.msra.mxu0 0
    %57 = vmatpush.bf16.msra.mxu0 0
    %58 = vmatpush.bf16.msra.mxu0 0
    %59 = vmatpush.bf16.msra.mxu0 0
    %60 = vmatpush.bf16.msra.mxu0 0
    %61 = vmatpush.bf16.msra.mxu0 0
    %62 = vmatpush.bf16.msra.mxu0 %v49
    %63 = vmatpush.bf16.msra.mxu0 %v48
    %64 = vmatmul.bf16.gmra.mxu0 %v54
    %v65 = vpop.f32.mrf.mxu0
    %v66 = vadd.f32 %v38, %v65
    %v67 = vpop.f32.mrf.mxu0
    %68 = vdwg.mxu0
    %v69 = vtanh.pop %v66
    %vm70 = vcmask 254976
    %71 = vst.msk [vmem:[#allocation2] sm:$0x3] %vm70, %v69
    %v72 = vpack.c.bf16 %v69, %v69
    %v73 = vld [vmem:[%s3] sm:$0xf]
    %v74 = vld [vmem:[%s3 + $0x4] sm:$0xf]
    %v75 = vld [vmem:[%s3 + $0x8] sm:$0xf]
    %v76 = vld [vmem:[%s3 + $0xc] sm:$0xf]
    %v77 = vld [vmem:[%s4] sm:$0x1]
    %v79 = vperm.slane %v77, 0
    %v85 = vunpack.c.l.b16 %v73
    %v86 = vunpack.c.l.b16 %v74
    %v87 = vunpack.c.l.b16 %v75
    %v88 = vunpack.c.l.b16 %v76
    %v89 = vpack.c.b16 %v86, %v85
    %v90 = vpack.c.b16 %v88, %v87
    %v94 = vsel %vm52, %v72, 0
    %96 = vmatpush.bf16.msra.mxu0 0
    %97 = vmatpush.bf16.msra.mxu0 0
    %98 = vmatpush.bf16.msra.mxu0 0
    %99 = vmatpush.bf16.msra.mxu0 0
    %100 = vmatpush.bf16.msra.mxu0 0
    %101 = vmatpush.bf16.msra.mxu0 0
    %102 = vmatpush.bf16.msra.mxu0 %v90
    %103 = vmatpush.bf16.msra.mxu0 %v89
    %104 = vmatmul.bf16.gmra.mxu0 %v94
    %v105 = vpop.f32.mrf.mxu0
    %v106 = vadd.f32 %v79, %v105
    %v107 = vpop.f32.mrf.mxu0
    %108 = vdwg.mxu0
    %v109 = vmax.f32 %v106, 0.0
    %v110 = vpack.c.bf16 %v109, %v109
    %v111 = vld [vmem:[%s5] sm:$0xf]
    %v112 = vld [vmem:[%s5 + $0x4] sm:$0xf]
    %v113 = vld [vmem:[%s5 + $0x8] sm:$0xf]
    %v114 = vld [vmem:[%s5 + $0xc] sm:$0xf]
    %v115 = vld [vmem:[%s6] sm:$0x1]
    %v117 = vperm.slane %v115, 0
    %v123 = vunpack.c.l.b16 %v111
    %v124 = vunpack.c.l.b16 %v112
    %v125 = vunpack.c.l.b16 %v113
    %v126 = vunpack.c.l.b16 %v114
    %v127 = vpack.c.b16 %v124, %v123
    %v128 = vpack.c.b16 %v126, %v125
    %v132 = vsel %vm52, %v110, 0
    %134 = vmatpush.bf16.msra.mxu0 0
    %135 = vmatpush.bf16.msra.mxu0 0
    %136 = vmatpush.bf16.msra.mxu0 0
    %137 = vmatpush.bf16.msra.mxu0 0
    %138 = vmatpush.bf16.msra.mxu0 0
    %139 = vmatpush.bf16.msra.mxu0 0
    %140 = vmatpush.bf16.msra.mxu0 %v128
    %141 = vmatpush.bf16.msra.mxu0 %v127
    %142 = vmatmul.bf16.gmra.mxu0 %v132
    %v143 = vpop.f32.mrf.mxu0
    %v144 = vadd.f32 %v117, %v143
    %v145 = vpop.f32.mrf.mxu0
    %146 = vdwg.mxu0
    %vm147 = vcmask 123904
    %148 = vst.msk [vmem:[#allocation4] sm:$0x3] %vm147, %v144
    // Predicated region
    $region30: #{_lambda_.19} parent=1 // pred_check
      _
    $region31: #{_lambda_.19} parent=1 // pred_check_branch
      %150 = sbr.rel (0) target = $region33
    $region32: #{_lambda_.19} parent=1 // pred_region
      %152 = vsyncadd [#allocation3], 0
      %s154 = sshll.u32 [#allocation2], 4
      %s155 = int_to_ptr.vmem [resolvable:$true] %s154
      %s156 = sshll.u32 %s7, 4
      %s157 = int_to_ptr.hbm [resolvable:$true] %s156
      %159 = dma.vmem_to_hbm [thread:$0]  %s155, 32, %s157, [#allocation3]
    $region33: #{_lambda_.19} parent=1 // pred_fallthru
      _
    // Predicated region
    $region34: #{_lambda_.19} parent=1 // pred_check
      _
    $region35: #{_lambda_.19} parent=1 // pred_check_branch
      %161 = sbr.rel (0) target = $region37
    $region36: #{_lambda_.19} parent=1 // pred_region
      %163 = vsyncadd [#allocation5], 0
      %s165 = sshll.u32 [#allocation4], 4
      %s166 = int_to_ptr.vmem [resolvable:$true] %s165
      %s167 = sshll.u32 %s8, 4
      %s168 = int_to_ptr.hbm [resolvable:$true] %s167
      %170 = dma.vmem_to_hbm [thread:$0]  %s166, 32, %s168, [#allocation5]
    $region37: #{_lambda_.19} parent=1 // pred_fallthru
      _
    // Predicated region
    $region38: #{_lambda_.19} parent=1 // pred_check
      _
    $region39: #{_lambda_.19} parent=1 // pred_check_branch
      %172 = sbr.rel (0) target = $region41
    $region40: #{_lambda_.19} parent=1 // pred_region
      %174 = dma.done [#allocation3], 32
    $region41: #{_lambda_.19} parent=1 // pred_fallthru
      _
    // Predicated region
    $region42: #{_lambda_.19} parent=1 // pred_check
      _
    $region43: #{_lambda_.19} parent=1 // pred_check_branch
      %176 = sbr.rel (0) target = $region45
    $region44: #{_lambda_.19} parent=1 // pred_region
      %178 = dma.done [#allocation5], 32
    $region45: #{_lambda_.19} parent=1 // pred_fallthru
      _
    %179 = vsyncpa [#allocation3], 1
    %180 = vsyncpa [#allocation5], 1

</llo_original>
